<compile_context>
chip_gen: v6e
topology: v6e:2x2x1
jax: 0.10.0
libtpu: 0.0.40
codegen_flags: <defaults>
</compile_context>

<pallas_src>
import functools
import math

import jax
import jax.numpy as jnp
from jax import lax
from jax.experimental import pallas as pl
from jax.experimental.pallas import tpu as pltpu


def mha_kernel(x_ref, wq_ref, bq_ref, wkv_ref, bkv_ref, wo_ref, bo_ref,
               out_ref, *, num_heads, head_dim, q_block):
    """Grid = (batch, q_tiles). All heads + output projection fused per step."""
    nHD = num_heads * head_dim
    cdt = wq_ref.dtype                      # MXU input dtype (f32 or bf16)
    S = x_ref.shape[0]

    x_full = x_ref[...]                     # (S, H) — full sequence for K/V

    if q_block == S:                        # trace-time branch
        x_q = x_full
    else:
        qi = pl.program_id(1)
        q_start = pl.multiple_of(qi * q_block, q_block)
        x_q = x_ref[pl.ds(q_start, q_block), :]          # (TQ, H)

    # Q projection on the query tile only; 1/sqrt(Dh) already folded into Wq/bq.
    q_all = jnp.dot(x_q, wq_ref[...],
                    preferred_element_type=jnp.float32) + bq_ref[...]   # (TQ, nHD)
    # Fused K/V projection on the full sequence (one wide matmul).
    kv = jnp.dot(x_full, wkv_ref[...],
                 preferred_element_type=jnp.float32) + bkv_ref[...]     # (S, 2*nHD)

    # Static unrolled head loop (nH is small & compile-time constant here).
    head_outs = []
    for h in range(num_heads):
        lo = h * head_dim
        q = q_all[:, lo:lo + head_dim].astype(cdt)             # (TQ, Dh)
        k = kv[:, lo:lo + head_dim].astype(cdt)                # (S, Dh)
        v = kv[:, nHD + lo:nHD + lo + head_dim].astype(cdt)    # (S, Dh)

        # Contract the Dh axes directly -> no materialized k transpose (XLU).
        s = lax.dot_general(q, k,
                            dimension_numbers=(((1,), (1,)), ((), ())),
                            preferred_element_type=jnp.float32)          # (TQ, S)
        # Softmax kept in f32 (v5e VPU/EUP have no bf16 path).
        s = s - jnp.max(s, axis=-1, keepdims=True)
        p = jnp.exp(s)
        probs = p * pl.reciprocal(jnp.sum(p, axis=-1, keepdims=True), approx=True)
        # TODO(synk): attention-probs dropout omitted (eval-mode identity).

        head_outs.append(jnp.dot(probs.astype(cdt), v,
                                 preferred_element_type=jnp.float32))    # (TQ, Dh)

    # concat(heads) in registers, then ONE wide matmul: (TQ, nHD) @ (nHD, H).
    attn = jnp.concatenate(head_outs, axis=-1).astype(cdt)
    out = jnp.dot(attn, wo_ref[...],
                  preferred_element_type=jnp.float32) + bo_ref[...]
    # TODO(synk): hidden_dropout_prob omitted (eval-mode identity).
    out_ref[...] = out.astype(out_ref.dtype)


def _pack_params(wq, wk, wv, bq, bk, bv, wo, bo, mxu_dtype=None):
    """Fuse per-head parameters into wide, MXU-friendly matrices.

    Q weights/biases get the 1/sqrt(Dh) scale folded in (constant-side, free).
    Fused axis layout: per-head contiguous Dh chunks [h0 | h1 | ...]; K and V
    are concatenated into one (H, 2*nHD) matrix (matches in-kernel slicing).
    """
    nH, H, Dh = wq.shape
    nHD = nH * Dh
    inv_sqrt_d = 1.0 / math.sqrt(Dh)

    def fuse_w(w):   # (nH, H, Dh) -> (H, nH*Dh)
        return jnp.transpose(w, (1, 0, 2)).reshape(H, nHD)

    def fuse_b(b):   # (nH, 1, Dh) -> (1, nH*Dh)
        return jnp.transpose(b, (1, 0, 2)).reshape(1, nHD)

    wq_f = fuse_w(wq) * inv_sqrt_d
    bq_f = fuse_b(bq) * inv_sqrt_d
    wkv_f = jnp.concatenate([fuse_w(wk), fuse_w(wv)], axis=-1)   # (H, 2*nHD)
    bkv_f = jnp.concatenate([fuse_b(bk), fuse_b(bv)], axis=-1)   # (1, 2*nHD)
    wo_f = wo.reshape(nHD, H)                                     # (nH*Dh, H)

    wdt = mxu_dtype if mxu_dtype is not None else jnp.float32
    return (wq_f.astype(wdt), bq_f.astype(jnp.float32),
            wkv_f.astype(wdt), bkv_f.astype(jnp.float32),
            wo_f.astype(wdt), bo.astype(jnp.float32))


def multi_head_attention(x, wq, wk, wv, bq, bk, bv, wo, bo, *,
                         mxu_dtype=None, q_block=None):
    """
    x  : (B, S, H)
    wq, wk, wv : (nH, H, Dh)   per-head projection weights
    bq, bk, bv : (nH, 1, Dh)   per-head projection biases
    wo : (nH, Dh, H)           output projection split per head
    bo : (1, H)                output projection bias
    mxu_dtype : optional dtype (e.g. jnp.bfloat16) for MXU operands on v6e/v7x.
    returns (B, S, H)
    """
    B, S, H = x.shape
    nH, _, Dh = wq.shape
    nHD = nH * Dh

    # Guarantee >=2 parallel grid steps so both v7x TensorCores get work even
    # at batch 1. q_block stays a multiple of 8 (sublane tile) or equal to S.
    if q_block is None:
        q_block = (S // 2) if (B < 2 and S % 16 == 0) else S
    assert S % q_block == 0 and (q_block == S or q_block % 8 == 0)
    num_q = S // q_block

    wq_f, bq_f, wkv_f, bkv_f, wo_f, bo_f = _pack_params(
        wq, wk, wv, bq, bk, bv, wo, bo, mxu_dtype)
    x_in = x.astype(mxu_dtype) if mxu_dtype is not None else x

    # VMEM budget: actual resident set (weights incl. pipeline buffers,
    # double-buffered x/out tiles, in-kernel temporaries) with ~1.5x headroom,
    # clamped to the device's physical VMEM capacity.
    wbytes = jnp.dtype(wq_f.dtype).itemsize
    xbytes = jnp.dtype(x_in.dtype).itemsize
    f32 = 4
    resident_bytes = (
        2 * wbytes * (H * nHD + H * 2 * nHD + nHD * H)       # Wq, Wkv, Wo (x2 bufs)
        + 2 * f32 * (nHD + 2 * nHD + H)                      # biases
        + 2 * xbytes * S * H                                 # x tile (double-buffered)
        + 2 * f32 * q_block * H                              # out tile (double-buffered)
        + f32 * (q_block * nHD + S * 2 * nHD                 # q_all, kv
                 + 3 * q_block * S + 2 * q_block * nHD)      # scores/softmax temps, head outs
    )
    vmem_limit = max(int(1.5 * resident_bytes), 4 * 1024 * 1024)
    try:
        vmem_cap = int(pltpu.get_tpu_info().vmem_capacity_bytes)
    except Exception:
        vmem_cap = 64 * 1024 * 1024          # conservative (v7x per-TC VMEM)
    vmem_limit = min(vmem_limit, vmem_cap)

    kernel = functools.partial(mha_kernel, num_heads=nH, head_dim=Dh,
                               q_block=q_block)

    # NOTE: at real model sizes make H (and q_block) multiples of 128 so the
    # output store is lane-dense (unmasked vst); toy H=32 is unavoidably masked.
    return pl.pallas_call(
        kernel,
        out_shape=jax.ShapeDtypeStruct((B, S, H), x.dtype),
        grid_spec=pltpu.PrefetchScalarGridSpec(
            num_scalar_prefetch=0,
            grid=(B, num_q),                                   # heads fused in-kernel
            in_specs=[
                pl.BlockSpec((None, S, H), lambda b, qi: (b, 0, 0)),      # x (full seq)
                pl.BlockSpec((H, nHD), lambda b, qi: (0, 0)),             # Wq  (resident)
                pl.BlockSpec((1, nHD), lambda b, qi: (0, 0)),             # bq  (resident)
                pl.BlockSpec((H, 2 * nHD), lambda b, qi: (0, 0)),         # Wkv (resident)
                pl.BlockSpec((1, 2 * nHD), lambda b, qi: (0, 0)),         # bkv (resident)
                pl.BlockSpec((nHD, H), lambda b, qi: (0, 0)),             # Wo  (resident)
                pl.BlockSpec((1, H), lambda b, qi: (0, 0)),               # bo  (resident)
            ],
            out_specs=pl.BlockSpec((None, q_block, H), lambda b, qi: (b, qi, 0)),
        ),
        compiler_params=pltpu.CompilerParams(
            dimension_semantics=("parallel", "parallel"),   # batch x q-tiles -> both TCs
            vmem_limit_bytes=vmem_limit,
        ),
    )(x_in, wq_f, bq_f, wkv_f, bkv_f, wo_f, bo_f)


def reference_mha(x, wq, wk, wv, bq, bk, bv, wo, bo):
    """Pure-JAX reference mirroring the PyTorch module (eval mode)."""
    nH, H, Dh = wq.shape
    outs = []
    for h in range(nH):
        q = x @ wq[h] + bq[h]          # (B,S,Dh)
        k = x @ wk[h] + bk[h]
        v = x @ wv[h] + bv[h]
        s = jnp.einsum("bqd,bkd->bqk", q, k) / math.sqrt(Dh)
        p = jax.nn.softmax(s, axis=-1)
        outs.append(jnp.einsum("bqk,bkd->bqd", p, v))
    cat = jnp.concatenate(outs, axis=-1)              # (B,S,all_head)
    wo_full = wo.reshape(nH * Dh, H)
    return cat @ wo_full + bo[0]


if __name__ == "__main__":
    # cfg: hidden_size=32, num_attention_heads=4, qkv_bias=True (eval mode)
    B, S, H, nH = 2, 8, 32, 4
    Dh = H // nH

    key = jax.random.PRNGKey(0)
    ks = jax.random.split(key, 10)
    scale = 0.05
    x = jax.random.normal(ks[0], (B, S, H), jnp.float32)
    wq = scale * jax.random.normal(ks[1], (nH, H, Dh), jnp.float32)
    wk = scale * jax.random.normal(ks[2], (nH, H, Dh), jnp.float32)
    wv = scale * jax.random.normal(ks[3], (nH, H, Dh), jnp.float32)
    bq = scale * jax.random.normal(ks[4], (nH, 1, Dh), jnp.float32)
    bk = scale * jax.random.normal(ks[5], (nH, 1, Dh), jnp.float32)
    bv = scale * jax.random.normal(ks[6], (nH, 1, Dh), jnp.float32)
    # output_projection: Linear(all_head_size=H, hidden_size=H); split per head.
    wo = scale * jax.random.normal(ks[7], (nH, Dh, H), jnp.float32)
    bo = scale * jax.random.normal(ks[8], (1, H), jnp.float32)

    out = multi_head_attention(x, wq, wk, wv, bq, bk, bv, wo, bo)
    out = jax.block_until_ready(out)

    ref = reference_mha(x, wq, wk, wv, bq, bk, bv, wo, bo)
    assert out.shape == (B, S, H)
    # approx=True softmax reciprocal (EUP) => slightly looser tolerance than 1e-5.
    err = jnp.max(jnp.abs(out - ref))
    assert jnp.allclose(out, ref, atol=2e-3, rtol=2e-3), f"max err {err}"

    print("KERNEL_OK")
</pallas_src>

<mosaic_0001>
module attributes {stable_mosaic.version = 11 : i64} {
  func.func @mha_kernel(%arg0: i32, %arg1: i32, %arg2: memref<1x8x32xf32, #tpu.memory_space<vmem>>, %arg3: memref<32x32xf32, #tpu.memory_space<vmem>>, %arg4: memref<1x32xf32, #tpu.memory_space<vmem>>, %arg5: memref<32x64xf32, #tpu.memory_space<vmem>>, %arg6: memref<1x64xf32, #tpu.memory_space<vmem>>, %arg7: memref<32x32xf32, #tpu.memory_space<vmem>>, %arg8: memref<1x32xf32, #tpu.memory_space<vmem>>, %arg9: memref<1x8x32xf32, #tpu.memory_space<vmem>>) attributes {dimension_semantics = [#tpu.dimension_semantics<parallel>, #tpu.dimension_semantics<parallel>], iteration_bounds = array<i64: 2, 1>, scalar_prefetch = 0 : i64, scratch_operands = 0 : i64, tpu.core_type = #tpu.core_type<tc>, window_params = [{transform_indices = @transform_0, window_bounds = array<i64: 1, 8, 32>}, {pipeline_mode = #tpu.pipeline_mode<synchronous>, transform_indices = @transform_1, window_bounds = array<i64: 32, 32>}, {pipeline_mode = #tpu.pipeline_mode<synchronous>, transform_indices = @transform_2, window_bounds = array<i64: 1, 32>}, {pipeline_mode = #tpu.pipeline_mode<synchronous>, transform_indices = @transform_3, window_bounds = array<i64: 32, 64>}, {pipeline_mode = #tpu.pipeline_mode<synchronous>, transform_indices = @transform_4, window_bounds = array<i64: 1, 64>}, {pipeline_mode = #tpu.pipeline_mode<synchronous>, transform_indices = @transform_5, window_bounds = array<i64: 32, 32>}, {pipeline_mode = #tpu.pipeline_mode<synchronous>, transform_indices = @transform_6, window_bounds = array<i64: 1, 32>}, {transform_indices = @transform_7, window_bounds = array<i64: 1, 8, 32>}]} {
    %c0 = arith.constant 0 : index
    %c0_0 = arith.constant 0 : index
    %c0_1 = arith.constant 0 : index
    %0 = vector.load %arg2[%c0, %c0_0, %c0_1] : memref<1x8x32xf32, #tpu.memory_space<vmem>>, vector<1x8x32xf32>
    %1 = vector.shape_cast %0 : vector<1x8x32xf32> to vector<8x32xf32>
    %c0_2 = arith.constant 0 : index
    %c0_3 = arith.constant 0 : index
    %2 = vector.load %arg3[%c0_2, %c0_3] : memref<32x32xf32, #tpu.memory_space<vmem>>, vector<32x32xf32>
    %cst = arith.constant dense<0.000000e+00> : vector<8x32xf32>
    %3 = tpu.matmul %1, %2, %cst {dimension_numbers = #tpu.dot_dimension_numbers<[1], [0], [0], [1], [0, 0, 1, 1], [], []>} : vector<8x32xf32>, vector<32x32xf32>, vector<8x32xf32> -> vector<8x32xf32>
    %c0_4 = arith.constant 0 : index
    %c0_5 = arith.constant 0 : index
    %4 = vector.load %arg4[%c0_4, %c0_5] : memref<1x32xf32, #tpu.memory_space<vmem>>, vector<1x32xf32>
    %5 = vector.broadcast %4 : vector<1x32xf32> to vector<8x32xf32>
    %6 = arith.addf %3, %5 : vector<8x32xf32>
    %c0_6 = arith.constant 0 : index
    %c0_7 = arith.constant 0 : index
    %7 = vector.load %arg5[%c0_6, %c0_7] : memref<32x64xf32, #tpu.memory_space<vmem>>, vector<32x64xf32>
    %cst_8 = arith.constant dense<0.000000e+00> : vector<8x64xf32>
    %8 = tpu.matmul %1, %7, %cst_8 {dimension_numbers = #tpu.dot_dimension_numbers<[1], [0], [0], [1], [0, 0, 1, 1], [], []>} : vector<8x32xf32>, vector<32x64xf32>, vector<8x64xf32> -> vector<8x64xf32>
    %c0_9 = arith.constant 0 : index
    %c0_10 = arith.constant 0 : index
    %9 = vector.load %arg6[%c0_9, %c0_10] : memref<1x64xf32, #tpu.memory_space<vmem>>, vector<1x64xf32>
    %10 = vector.broadcast %9 : vector<1x64xf32> to vector<8x64xf32>
    %11 = arith.addf %8, %10 : vector<8x64xf32>
    %12 = vector.extract_strided_slice %6 {offsets = [0, 0], sizes = [8, 8], strides = [1, 1]} : vector<8x32xf32> to vector<8x8xf32>
    %13 = vector.extract_strided_slice %11 {offsets = [0, 0], sizes = [8, 8], strides = [1, 1]} : vector<8x64xf32> to vector<8x8xf32>
    %14 = vector.extract_strided_slice %11 {offsets = [0, 32], sizes = [8, 8], strides = [1, 1]} : vector<8x64xf32> to vector<8x8xf32>
    %cst_11 = arith.constant dense<0.000000e+00> : vector<8x8xf32>
    %15 = tpu.matmul %12, %13, %cst_11 {dimension_numbers = #tpu.dot_dimension_numbers<[1], [1], [0], [0], [0, 0, 1, 0], [], []>} : vector<8x8xf32>, vector<8x8xf32>, vector<8x8xf32> -> vector<8x8xf32>
    %cst_12 = arith.constant dense<0xFF800000> : vector<8xf32>
    %16 = vector.multi_reduction <maximumf>, %15, %cst_12 [1] : vector<8x8xf32> to vector<8xf32>
    %17 = vector.shape_cast %16 : vector<8xf32> to vector<8x1xf32>
    %18 = vector.broadcast %17 : vector<8x1xf32> to vector<8x8xf32>
    %19 = arith.subf %15, %18 : vector<8x8xf32>
    %20 = math.exp %19 : vector<8x8xf32>
    %cst_13 = arith.constant dense<0.000000e+00> : vector<8xf32>
    %21 = vector.multi_reduction <add>, %20, %cst_13 [1] : vector<8x8xf32> to vector<8xf32>
    %22 = vector.shape_cast %21 : vector<8xf32> to vector<8x1xf32>
    %23 = tpu.reciprocal %22 {approx = true} : vector<8x1xf32> -> vector<8x1xf32>
    %24 = vector.broadcast %23 : vector<8x1xf32> to vector<8x8xf32>
    %25 = arith.mulf %20, %24 : vector<8x8xf32>
    %cst_14 = arith.constant dense<0.000000e+00> : vector<8x8xf32>
    %26 = tpu.matmul %25, %14, %cst_14 {dimension_numbers = #tpu.dot_dimension_numbers<[1], [0], [0], [1], [0, 0, 1, 1], [], []>} : vector<8x8xf32>, vector<8x8xf32>, vector<8x8xf32> -> vector<8x8xf32>
    %27 = vector.extract_strided_slice %6 {offsets = [0, 8], sizes = [8, 8], strides = [1, 1]} : vector<8x32xf32> to vector<8x8xf32>
    %28 = vector.extract_strided_slice %11 {offsets = [0, 8], sizes = [8, 8], strides = [1, 1]} : vector<8x64xf32> to vector<8x8xf32>
    %29 = vector.extract_strided_slice %11 {offsets = [0, 40], sizes = [8, 8], strides = [1, 1]} : vector<8x64xf32> to vector<8x8xf32>
    %cst_15 = arith.constant dense<0.000000e+00> : vector<8x8xf32>
    %30 = tpu.matmul %27, %28, %cst_15 {dimension_numbers = #tpu.dot_dimension_numbers<[1], [1], [0], [0], [0, 0, 1, 0], [], []>} : vector<8x8xf32>, vector<8x8xf32>, vector<8x8xf32> -> vector<8x8xf32>
    %cst_16 = arith.constant dense<0xFF800000> : vector<8xf32>
    %31 = vector.multi_reduction <maximumf>, %30, %cst_16 [1] : vector<8x8xf32> to vector<8xf32>
    %32 = vector.shape_cast %31 : vector<8xf32> to vector<8x1xf32>
    %33 = vector.broadcast %32 : vector<8x1xf32> to vector<8x8xf32>
    %34 = arith.subf %30, %33 : vector<8x8xf32>
    %35 = math.exp %34 : vector<8x8xf32>
    %cst_17 = arith.constant dense<0.000000e+00> : vector<8xf32>
    %36 = vector.multi_reduction <add>, %35, %cst_17 [1] : vector<8x8xf32> to vector<8xf32>
    %37 = vector.shape_cast %36 : vector<8xf32> to vector<8x1xf32>
    %38 = tpu.reciprocal %37 {approx = true} : vector<8x1xf32> -> vector<8x1xf32>
    %39 = vector.broadcast %38 : vector<8x1xf32> to vector<8x8xf32>
    %40 = arith.mulf %35, %39 : vector<8x8xf32>
    %cst_18 = arith.constant dense<0.000000e+00> : vector<8x8xf32>
    %41 = tpu.matmul %40, %29, %cst_18 {dimension_numbers = #tpu.dot_dimension_numbers<[1], [0], [0], [1], [0, 0, 1, 1], [], []>} : vector<8x8xf32>, vector<8x8xf32>, vector<8x8xf32> -> vector<8x8xf32>
    %42 = vector.extract_strided_slice %6 {offsets = [0, 16], sizes = [8, 8], strides = [1, 1]} : vector<8x32xf32> to vector<8x8xf32>
    %43 = vector.extract_strided_slice %11 {offsets = [0, 16], sizes = [8, 8], strides = [1, 1]} : vector<8x64xf32> to vector<8x8xf32>
    %44 = vector.extract_strided_slice %11 {offsets = [0, 48], sizes = [8, 8], strides = [1, 1]} : vector<8x64xf32> to vector<8x8xf32>
    %cst_19 = arith.constant dense<0.000000e+00> : vector<8x8xf32>
    %45 = tpu.matmul %42, %43, %cst_19 {dimension_numbers = #tpu.dot_dimension_numbers<[1], [1], [0], [0], [0, 0, 1, 0], [], []>} : vector<8x8xf32>, vector<8x8xf32>, vector<8x8xf32> -> vector<8x8xf32>
    %cst_20 = arith.constant dense<0xFF800000> : vector<8xf32>
    %46 = vector.multi_reduction <maximumf>, %45, %cst_20 [1] : vector<8x8xf32> to vector<8xf32>
    %47 = vector.shape_cast %46 : vector<8xf32> to vector<8x1xf32>
    %48 = vector.broadcast %47 : vector<8x1xf32> to vector<8x8xf32>
    %49 = arith.subf %45, %48 : vector<8x8xf32>
    %50 = math.exp %49 : vector<8x8xf32>
    %cst_21 = arith.constant dense<0.000000e+00> : vector<8xf32>
    %51 = vector.multi_reduction <add>, %50, %cst_21 [1] : vector<8x8xf32> to vector<8xf32>
    %52 = vector.shape_cast %51 : vector<8xf32> to vector<8x1xf32>
    %53 = tpu.reciprocal %52 {approx = true} : vector<8x1xf32> -> vector<8x1xf32>
    %54 = vector.broadcast %53 : vector<8x1xf32> to vector<8x8xf32>
    %55 = arith.mulf %50, %54 : vector<8x8xf32>
    %cst_22 = arith.constant dense<0.000000e+00> : vector<8x8xf32>
    %56 = tpu.matmul %55, %44, %cst_22 {dimension_numbers = #tpu.dot_dimension_numbers<[1], [0], [0], [1], [0, 0, 1, 1], [], []>} : vector<8x8xf32>, vector<8x8xf32>, vector<8x8xf32> -> vector<8x8xf32>
    %57 = vector.extract_strided_slice %6 {offsets = [0, 24], sizes = [8, 8], strides = [1, 1]} : vector<8x32xf32> to vector<8x8xf32>
    %58 = vector.extract_strided_slice %11 {offsets = [0, 24], sizes = [8, 8], strides = [1, 1]} : vector<8x64xf32> to vector<8x8xf32>
    %59 = vector.extract_strided_slice %11 {offsets = [0, 56], sizes = [8, 8], strides = [1, 1]} : vector<8x64xf32> to vector<8x8xf32>
    %cst_23 = arith.constant dense<0.000000e+00> : vector<8x8xf32>
    %60 = tpu.matmul %57, %58, %cst_23 {dimension_numbers = #tpu.dot_dimension_numbers<[1], [1], [0], [0], [0, 0, 1, 0], [], []>} : vector<8x8xf32>, vector<8x8xf32>, vector<8x8xf32> -> vector<8x8xf32>
    %cst_24 = arith.constant dense<0xFF800000> : vector<8xf32>
    %61 = vector.multi_reduction <maximumf>, %60, %cst_24 [1] : vector<8x8xf32> to vector<8xf32>
    %62 = vector.shape_cast %61 : vector<8xf32> to vector<8x1xf32>
    %63 = vector.broadcast %62 : vector<8x1xf32> to vector<8x8xf32>
    %64 = arith.subf %60, %63 : vector<8x8xf32>
    %65 = math.exp %64 : vector<8x8xf32>
    %cst_25 = arith.constant dense<0.000000e+00> : vector<8xf32>
    %66 = vector.multi_reduction <add>, %65, %cst_25 [1] : vector<8x8xf32> to vector<8xf32>
    %67 = vector.shape_cast %66 : vector<8xf32> to vector<8x1xf32>
    %68 = tpu.reciprocal %67 {approx = true} : vector<8x1xf32> -> vector<8x1xf32>
    %69 = vector.broadcast %68 : vector<8x1xf32> to vector<8x8xf32>
    %70 = arith.mulf %65, %69 : vector<8x8xf32>
    %cst_26 = arith.constant dense<0.000000e+00> : vector<8x8xf32>
    %71 = tpu.matmul %70, %59, %cst_26 {dimension_numbers = #tpu.dot_dimension_numbers<[1], [0], [0], [1], [0, 0, 1, 1], [], []>} : vector<8x8xf32>, vector<8x8xf32>, vector<8x8xf32> -> vector<8x8xf32>
    %72 = tpu.concatenate %26, %41, %56, %71 in 1 : vector<8x8xf32>, vector<8x8xf32>, vector<8x8xf32>, vector<8x8xf32> -> vector<8x32xf32>
    %c0_27 = arith.constant 0 : index
    %c0_28 = arith.constant 0 : index
    %73 = vector.load %arg7[%c0_27, %c0_28] : memref<32x32xf32, #tpu.memory_space<vmem>>, vector<32x32xf32>
    %cst_29 = arith.constant dense<0.000000e+00> : vector<8x32xf32>
    %74 = tpu.matmul %72, %73, %cst_29 {dimension_numbers = #tpu.dot_dimension_numbers<[1], [0], [0], [1], [0, 0, 1, 1], [], []>} : vector<8x32xf32>, vector<32x32xf32>, vector<8x32xf32> -> vector<8x32xf32>
    %c0_30 = arith.constant 0 : index
    %c0_31 = arith.constant 0 : index
    %75 = vector.load %arg8[%c0_30, %c0_31] : memref<1x32xf32, #tpu.memory_space<vmem>>, vector<1x32xf32>
    %76 = vector.broadcast %75 : vector<1x32xf32> to vector<8x32xf32>
    %77 = arith.addf %74, %76 : vector<8x32xf32>
    %c0_32 = arith.constant 0 : index
    %c0_33 = arith.constant 0 : index
    %c0_34 = arith.constant 0 : index
    %78 = vector.load %arg9[%c0_32, %c0_33, %c0_34] : memref<1x8x32xf32, #tpu.memory_space<vmem>>, vector<1x8x32xf32>
    %79 = vector.shape_cast %78 : vector<1x8x32xf32> to vector<8x32xf32>
    %80 = vector.shape_cast %77 : vector<8x32xf32> to vector<1x8x32xf32>
    tpu.vector_store %arg9[%c0_32, %c0_33, %c0_34], %80 {strides = array<i32>} : memref<1x8x32xf32, #tpu.memory_space<vmem>>, vector<1x8x32xf32>,
    return
  }
  func.func @transform_0(%arg0: i32, %arg1: i32) -> (i32, i32, i32) {
    %c0_i32 = arith.constant 0 : i32
    %c0_i32_0 = arith.constant 0 : i32
    %c0_i32_1 = arith.constant 0 : i32
    return %arg0, %c0_i32, %c0_i32_0 : i32, i32, i32
  }
  func.func @transform_1(%arg0: i32, %arg1: i32) -> (i32, i32) {
    %c0_i32 = arith.constant 0 : i32
    %c0_i32_0 = arith.constant 0 : i32
    %c0_i32_1 = arith.constant 0 : i32
    return %c0_i32, %c0_i32_0 : i32, i32
  }
  func.func @transform_2(%arg0: i32, %arg1: i32) -> (i32, i32) {
    %c0_i32 = arith.constant 0 : i32
    %c0_i32_0 = arith.constant 0 : i32
    %c0_i32_1 = arith.constant 0 : i32
    return %c0_i32, %c0_i32_0 : i32, i32
  }
  func.func @transform_3(%arg0: i32, %arg1: i32) -> (i32, i32) {
    %c0_i32 = arith.constant 0 : i32
    %c0_i32_0 = arith.constant 0 : i32
    %c0_i32_1 = arith.constant 0 : i32
    return %c0_i32, %c0_i32_0 : i32, i32
  }
  func.func @transform_4(%arg0: i32, %arg1: i32) -> (i32, i32) {
    %c0_i32 = arith.constant 0 : i32
    %c0_i32_0 = arith.constant 0 : i32
    %c0_i32_1 = arith.constant 0 : i32
    return %c0_i32, %c0_i32_0 : i32, i32
  }
  func.func @transform_5(%arg0: i32, %arg1: i32) -> (i32, i32) {
    %c0_i32 = arith.constant 0 : i32
    %c0_i32_0 = arith.constant 0 : i32
    %c0_i32_1 = arith.constant 0 : i32
    return %c0_i32, %c0_i32_0 : i32, i32
  }
  func.func @transform_6(%arg0: i32, %arg1: i32) -> (i32, i32) {
    %c0_i32 = arith.constant 0 : i32
    %c0_i32_0 = arith.constant 0 : i32
    %c0_i32_1 = arith.constant 0 : i32
    return %c0_i32, %c0_i32_0 : i32, i32
  }
  func.func @transform_7(%arg0: i32, %arg1: i32) -> (i32, i32, i32) {
    %c0_i32 = arith.constant 0 : i32
    %c0_i32_0 = arith.constant 0 : i32
    return %arg0, %arg1, %c0_i32 : i32, i32, i32
  }
}

</mosaic_0001>

<llo_original>
// kernel: tpu_custom_call.1
$region0: #{tpu_custom_call.1}
  #allocation0 [shape = 'u32[]', space=smem, size = 0x4, offset = 0x4, fixed_abs, tag = 'smem constant byte address 0x4 - core index']
  #allocation1 [shape = 'u32[144,128]{1,0:T(1,128)}', space=vmem, size = 0x12000, scoped, tag = 'internal scratch']
  %s0 = inlined_call_operand.hbm [shape: f32[2,8,32], index: 0, kind: input, shape index: {}]
  %s1 = inlined_call_operand.hbm [shape: f32[32,32], index: 1, kind: input, shape index: {}]
  %s2 = inlined_call_operand.vmem [shape: f32[1,32], index: 2, kind: input, shape index: {}]
  %s3 = inlined_call_operand.hbm [shape: f32[32,64], index: 3, kind: input, shape index: {}]
  %s4 = inlined_call_operand.vmem [shape: f32[1,64], index: 4, kind: input, shape index: {}]
  %s5 = inlined_call_operand.hbm [shape: f32[32,32], index: 5, kind: input, shape index: {}]
  %s6 = inlined_call_operand.vmem [shape: f32[1,32], index: 6, kind: input, shape index: {}]
  %s7 = inlined_call_operand.hbm [shape: f32[2,8,32], index: 7, kind: output, shape index: {}]
  %s8 = sld [smem:[#allocation0]]
  $region77: #{tpu_custom_call.1} parent=0
    _
  %s10 = ssub.s32 1, %s8
  %s11 = scalar_select 0, %s10, %s8
  $region1: #{tpu_custom_call.1} parent=0
    #allocation2 [shape = 'u8[8192]{0}', space=vmem, size = 0x2000, scoped, tag = 'input window, operand 0']
    #allocation3 [shape = 's32[2]{0}', space=sflag, size = 0x8, scoped, tag = 'scoped memory for tpu_custom_call.1']
    #allocation4 [shape = 's32[2]{0}', space=sflag, size = 0x8, scoped, tag = 'scoped memory for tpu_custom_call.1']
    #allocation5 [shape = 'u8[16384]{0}', space=vmem, size = 0x4000, scoped, tag = 'input window, operand 1, single buffered']
    #allocation6 [shape = 's32[1]{0}', space=sflag, size = 0x4, scoped, tag = 'scoped memory for tpu_custom_call.1']
    #allocation7 [shape = 'u8[16384]{0}', space=vmem, size = 0x4000, scoped, tag = 'input window, operand 3, single buffered']
    #allocation8 [shape = 'u8[16384]{0}', space=vmem, size = 0x4000, scoped, tag = 'input window, operand 5, single buffered']
    #allocation9 [shape = 's32[1]{0}', space=sflag, size = 0x4, scoped, tag = 'scoped memory for tpu_custom_call.1']
    #allocation10 [shape = 'u8[8192]{0}', space=vmem, size = 0x2000, scoped, tag = 'output window, operand 0']
    %12 = vsyncpa [#allocation3], 0
    %s13 = scalar_lea.sflag [#allocation3], 1
    %14 = vsyncpa %s13, 0
    %15 = vsyncpa [#allocation6], 0
    %16 = vsyncpa [#allocation9], 0
    %17 = vsyncpa [#allocation4], 0
    %s18 = scalar_lea.sflag [#allocation4], 1
    %19 = vsyncpa %s18, 0
    loop: start=0, step=1, limit=4
    $region2: #{tpu_custom_call.1} parent=1 // loop_pre_header
      _
    $region3: #{tpu_custom_call.1} parent=1 // loop_header
      %s21 = sphi 0, %s25
      %p22 = scmp.ge.s32.totalorder %s21, 4
      %s28 = sphi 0, %s40
      %s29 = sphi 0, %s36
      %s30 = sphi 0, %s28
      %s31 = sphi 0, %s29
      %s32 = sphi 0, %s30
      %s33 = sphi 0, %s31
      %s43 = sphi 0, %s45
      %s46 = sphi 0, %s43
      %s47 = sphi 0, %s46
      %s63 = sphi 0, %s47
      %s67 = sphi 0, %s67
      %s69 = sphi 0, %s67
      %s70 = sphi 0, %s69
      %s84 = sphi 0, %s70
      %s88 = sphi 0, %s88
      %s90 = sphi 0, %s88
      %s91 = sphi 0, %s90
      %s105 = sphi 0, %s91
      %s109 = sphi 0, %s109
      %s111 = sphi 0, %s109
      %s112 = sphi 0, %s111
      %s126 = sphi 0, %s112
      %s130 = sphi 0, %s130
      %s132 = sphi 0, %s130
      %s133 = sphi 0, %s132
      %s147 = sphi 0, %s133
      %s151 = sphi 0, %s151
      %s153 = sphi 0, %s151
      %s154 = sphi 0, %s153
      %s168 = sphi 0, %s154
      %s172 = sphi 0, %s172
      %s174 = sphi 0, %s172
      %s175 = sphi 0, %s174
      %s189 = sphi 0, %s175
      %s197 = sphi 0, %s199
      %s200 = sphi 0, %s197
      %s201 = sphi 0, %s200
      %s217 = sphi 0, %s201
    $region4: #{tpu_custom_call.1} parent=1 // loop_header_branch
      %24 = sbr.rel (%p22) target = $region8
    $region5: #{tpu_custom_call.1} parent=1 // loop_body
      %s26 = ssub.s32 %s21, 1
      %s27 = ssub.s32 %s21, 2
      %s34 = sadd.s32 1, %s29
      %p35 = scmp.ge.s32.totalorder %s34, 1
      %s36 = scalar_select %p35, 0, %s34
      %s37 = sadd.s32 1, %s28
      %s38 = scalar_select %p35, %s37, %s28
      %p39 = scmp.ge.s32.totalorder %s38, 2
      %s40 = scalar_select %p39, 0, %s38
      %s41 = ssub.s32 %s28, %s40
      %p42 = scmp.eq.s32.totalorder %s41, 0
      %s44 = sadd.s32 %s43, 1
      %s45 = scalar_select %p42, %s43, %s44
      %p48 = pneg %p42
      %p49 = scmp.eq.s32.totalorder %s21, 1
      %p50 = por %p48, %p49
      %p51 = scmp.ne.s32.totalorder %s43, %s46
      %p52 = scmp.eq.s32.totalorder %s21, 0
      %p53 = por %p51, %p52
      %p54 = scmp.ne.s32.totalorder %s43, %s46
      %p55 = scmp.eq.s32.totalorder %s26, 1
      %p56 = por %p54, %p55
      %p57 = scmp.ne.s32.totalorder %s46, %s47
      %p58 = scmp.eq.s32.totalorder %s26, 0
      %p59 = por %p57, %p58
      %p60 = scmp.ne.s32.totalorder %s46, %s47
      %p61 = scmp.eq.s32.totalorder %s27, 1
      %p62 = por %p60, %p61
      %p64 = scmp.ne.s32.totalorder %s47, %s63
      %p65 = scmp.eq.s32.totalorder %s27, 0
      %p66 = por %p64, %p65
      %s68 = sadd.s32 %s67, 1
      %p71 = scmp.eq.s32.totalorder %s21, 1
      %p72 = scmp.ne.s32.totalorder %s67, %s69
      %p73 = scmp.eq.s32.totalorder %s21, 0
      %p74 = por %p72, %p73
      %p75 = scmp.ne.s32.totalorder %s67, %s69
      %p76 = scmp.eq.s32.totalorder %s26, 1
      %p77 = por %p75, %p76
      %p78 = scmp.ne.s32.totalorder %s69, %s70
      %p79 = scmp.eq.s32.totalorder %s26, 0
      %p80 = por %p78, %p79
      %p81 = scmp.ne.s32.totalorder %s69, %s70
      %p82 = scmp.eq.s32.totalorder %s27, 1
      %p83 = por %p81, %p82
      %p85 = scmp.ne.s32.totalorder %s70, %s84
      %p86 = scmp.eq.s32.totalorder %s27, 0
      %p87 = por %p85, %p86
      %s89 = sadd.s32 %s88, 1
      %p92 = scmp.eq.s32.totalorder %s21, 1
      %p93 = scmp.ne.s32.totalorder %s88, %s90
      %p94 = scmp.eq.s32.totalorder %s21, 0
      %p95 = por %p93, %p94
      %p96 = scmp.ne.s32.totalorder %s88, %s90
      %p97 = scmp.eq.s32.totalorder %s26, 1
      %p98 = por %p96, %p97
      %p99 = scmp.ne.s32.totalorder %s90, %s91
      %p100 = scmp.eq.s32.totalorder %s26, 0
      %p101 = por %p99, %p100
      %p102 = scmp.ne.s32.totalorder %s90, %s91
      %p103 = scmp.eq.s32.totalorder %s27, 1
      %p104 = por %p102, %p103
      %p106 = scmp.ne.s32.totalorder %s91, %s105
      %p107 = scmp.eq.s32.totalorder %s27, 0
      %p108 = por %p106, %p107
      %s110 = sadd.s32 %s109, 1
      %p113 = scmp.eq.s32.totalorder %s21, 1
      %p114 = scmp.ne.s32.totalorder %s109, %s111
      %p115 = scmp.eq.s32.totalorder %s21, 0
      %p116 = por %p114, %p115
      %p117 = scmp.ne.s32.totalorder %s109, %s111
      %p118 = scmp.eq.s32.totalorder %s26, 1
      %p119 = por %p117, %p118
      %p120 = scmp.ne.s32.totalorder %s111, %s112
      %p121 = scmp.eq.s32.totalorder %s26, 0
      %p122 = por %p120, %p121
      %p123 = scmp.ne.s32.totalorder %s111, %s112
      %p124 = scmp.eq.s32.totalorder %s27, 1
      %p125 = por %p123, %p124
      %p127 = scmp.ne.s32.totalorder %s112, %s126
      %p128 = scmp.eq.s32.totalorder %s27, 0
      %p129 = por %p127, %p128
      %s131 = sadd.s32 %s130, 1
      %p134 = scmp.eq.s32.totalorder %s21, 1
      %p135 = scmp.ne.s32.totalorder %s130, %s132
      %p136 = scmp.eq.s32.totalorder %s21, 0
      %p137 = por %p135, %p136
      %p138 = scmp.ne.s32.totalorder %s130, %s132
      %p139 = scmp.eq.s32.totalorder %s26, 1
      %p140 = por %p138, %p139
      %p141 = scmp.ne.s32.totalorder %s132, %s133
      %p142 = scmp.eq.s32.totalorder %s26, 0
      %p143 = por %p141, %p142
      %p144 = scmp.ne.s32.totalorder %s132, %s133
      %p145 = scmp.eq.s32.totalorder %s27, 1
      %p146 = por %p144, %p145
      %p148 = scmp.ne.s32.totalorder %s133, %s147
      %p149 = scmp.eq.s32.totalorder %s27, 0
      %p150 = por %p148, %p149
      %s152 = sadd.s32 %s151, 1
      %p155 = scmp.eq.s32.totalorder %s21, 1
      %p156 = scmp.ne.s32.totalorder %s151, %s153
      %p157 = scmp.eq.s32.totalorder %s21, 0
      %p158 = por %p156, %p157
      %p159 = scmp.ne.s32.totalorder %s151, %s153
      %p160 = scmp.eq.s32.totalorder %s26, 1
      %p161 = por %p159, %p160
      %p162 = scmp.ne.s32.totalorder %s153, %s154
      %p163 = scmp.eq.s32.totalorder %s26, 0
      %p164 = por %p162, %p163
      %p165 = scmp.ne.s32.totalorder %s153, %s154
      %p166 = scmp.eq.s32.totalorder %s27, 1
      %p167 = por %p165, %p166
      %p169 = scmp.ne.s32.totalorder %s154, %s168
      %p170 = scmp.eq.s32.totalorder %s27, 0
      %p171 = por %p169, %p170
      %s173 = sadd.s32 %s172, 1
      %p176 = scmp.eq.s32.totalorder %s21, 1
      %p177 = scmp.ne.s32.totalorder %s172, %s174
      %p178 = scmp.eq.s32.totalorder %s21, 0
      %p179 = por %p177, %p178
      %p180 = scmp.ne.s32.totalorder %s172, %s174
      %p181 = scmp.eq.s32.totalorder %s26, 1
      %p182 = por %p180, %p181
      %p183 = scmp.ne.s32.totalorder %s174, %s175
      %p184 = scmp.eq.s32.totalorder %s26, 0
      %p185 = por %p183, %p184
      %p186 = scmp.ne.s32.totalorder %s174, %s175
      %p187 = scmp.eq.s32.totalorder %s27, 1
      %p188 = por %p186, %p187
      %p190 = scmp.ne.s32.totalorder %s175, %s189
      %p191 = scmp.eq.s32.totalorder %s27, 0
      %p192 = por %p190, %p191
      %s193 = ssub.s32 %s28, %s40
      %s194 = ssub.s32 %s29, %s36
      %s195 = sor.u32 %s193, %s194
      %p196 = scmp.eq.s32.totalorder %s195, 0
      %s198 = sadd.s32 %s197, 1
      %s199 = scalar_select %p196, %s197, %s198
      %p202 = pneg %p196
      %p203 = scmp.eq.s32.totalorder %s21, 1
      %p204 = por %p202, %p203
      %p205 = scmp.ne.s32.totalorder %s197, %s200
      %p206 = scmp.eq.s32.totalorder %s21, 0
      %p207 = por %p205, %p206
      %p208 = scmp.ne.s32.totalorder %s197, %s200
      %p209 = scmp.eq.s32.totalorder %s26, 1
      %p210 = por %p208, %p209
      %p211 = scmp.ne.s32.totalorder %s200, %s201
      %p212 = scmp.eq.s32.totalorder %s26, 0
      %p213 = por %p211, %p212
      %p214 = scmp.ne.s32.totalorder %s200, %s201
      %p215 = scmp.eq.s32.totalorder %s27, 1
      %p216 = por %p214, %p215
      %p218 = scmp.ne.s32.totalorder %s201, %s217
      %p219 = scmp.eq.s32.totalorder %s27, 0
      %p220 = por %p218, %p219
      %p221 = scmp.le.s32.totalorder 1, %s21
      %p222 = scmp.lt.s32.totalorder %s21, 3
      %p223 = pnand %p221, %p222
      %p224 = pneg %p223
      // Predicated region
      $region9: #{tpu_custom_call.1} parent=5 // pred_check
        _
      $region10: #{tpu_custom_call.1} parent=5 // pred_check_branch
        %226 = sbr.rel (%p223) target = $region12
      $region11: #{tpu_custom_call.1} parent=5 // pred_region
        %s227 = ssub.s32 %s21, 1
        // Predicated region
        $region13: #{tpu_custom_call.1} parent=11 // pred_check
          %p228 = pneg %p80
        $region14: #{tpu_custom_call.1} parent=11 // pred_check_branch
          %230 = sbr.rel (%p228) target = $region16
        $region15: #{tpu_custom_call.1} parent=11 // pred_region
          %s232 = ssub.s32 512, 512
          %233 = vsyncadd [#allocation6], %s232
          %s234 = sshll.u32 [#allocation5], 4
          %s235 = int_to_ptr.vmem [resolvable:$true] %s234
          %240 = dma.hbm_to_vmem [thread:$0]  %s1, 512, %s235, [#allocation6], 128, 128, 8
        $region16: #{tpu_custom_call.1} parent=11 // pred_fallthru
          _
        // Predicated region
        $region17: #{tpu_custom_call.1} parent=11 // pred_check
          %p241 = pneg %p101
        $region18: #{tpu_custom_call.1} parent=11 // pred_check_branch
          %243 = sbr.rel (%p241) target = $region20
        $region19: #{tpu_custom_call.1} parent=11 // pred_region
          _
        $region20: #{tpu_custom_call.1} parent=11 // pred_fallthru
          _
        // Predicated region
        $region21: #{tpu_custom_call.1} parent=11 // pred_check
          %p244 = pneg %p122
        $region22: #{tpu_custom_call.1} parent=11 // pred_check_branch
          %246 = sbr.rel (%p244) target = $region24
        $region23: #{tpu_custom_call.1} parent=11 // pred_region
          %s248 = ssub.s32 512, 512
          %249 = vsyncadd [#allocation6], %s248
          %s250 = sshll.u32 [#allocation7], 4
          %s251 = int_to_ptr.vmem [resolvable:$true] %s250
          %256 = dma.hbm_to_vmem [thread:$0]  %s3, 512, %s251, [#allocation6], 128, 128, 8
        $region24: #{tpu_custom_call.1} parent=11 // pred_fallthru
          _
        // Predicated region
        $region25: #{tpu_custom_call.1} parent=11 // pred_check
          %p257 = pneg %p143
        $region26: #{tpu_custom_call.1} parent=11 // pred_check_branch
          %259 = sbr.rel (%p257) target = $region28
        $region27: #{tpu_custom_call.1} parent=11 // pred_region
          _
        $region28: #{tpu_custom_call.1} parent=11 // pred_fallthru
          _
        // Predicated region
        $region29: #{tpu_custom_call.1} parent=11 // pred_check
          %p260 = pneg %p164
        $region30: #{tpu_custom_call.1} parent=11 // pred_check_branch
          %262 = sbr.rel (%p260) target = $region32
        $region31: #{tpu_custom_call.1} parent=11 // pred_region
          %s264 = ssub.s32 512, 512
          %265 = vsyncadd [#allocation9], %s264
          %s266 = sshll.u32 [#allocation8], 4
          %s267 = int_to_ptr.vmem [resolvable:$true] %s266
          %272 = dma.hbm_to_vmem [thread:$0]  %s5, 512, %s267, [#allocation9], 128, 128, 8
        $region32: #{tpu_custom_call.1} parent=11 // pred_fallthru
          _
        // Predicated region
        $region33: #{tpu_custom_call.1} parent=11 // pred_check
          %p273 = pneg %p185
        $region34: #{tpu_custom_call.1} parent=11 // pred_check_branch
          %275 = sbr.rel (%p273) target = $region36
        $region35: #{tpu_custom_call.1} parent=11 // pred_region
          _
        $region36: #{tpu_custom_call.1} parent=11 // pred_fallthru
          _
      $region12: #{tpu_custom_call.1} parent=5 // pred_fallthru
        _
      %p276 = scmp.lt.s32.totalorder %s21, 2
      // Predicated region
      $region37: #{tpu_custom_call.1} parent=5 // pred_check
        %p277 = pneg %p276
      $region38: #{tpu_custom_call.1} parent=5 // pred_check_branch
        %279 = sbr.rel (%p277) target = $region40
      $region39: #{tpu_custom_call.1} parent=5 // pred_region
        // Predicated region
        $region41: #{tpu_custom_call.1} parent=39 // pred_check
          %p280 = pneg %p53
        $region42: #{tpu_custom_call.1} parent=39 // pred_check_branch
          %282 = sbr.rel (%p280) target = $region44
        $region43: #{tpu_custom_call.1} parent=39 // pred_region
          %s283 = sand.u32 %s43, 1
          %s284 = scalar_lea.sflag [#allocation3], %s283
          %s285 = sand.u32 %s43, 1
          %s286 = smul.addr %s285, 8
          %s287 = scalar_lea.vmem [#allocation2], %s286
          %s289 = ssub.s32 128, 128
          %290 = vsyncadd %s284, %s289
          %s291 = smul.addr %s28, 128
          %s292 = scalar_lea.hbm %s0, %s291
          %s294 = sshll.u32 %s287, 4
          %s295 = int_to_ptr.vmem [resolvable:$true] %s294
          %297 = dma.hbm_to_vmem [thread:$0]  %s292, 128, %s295, %s284
        $region44: #{tpu_custom_call.1} parent=39 // pred_fallthru
          _
      $region40: #{tpu_custom_call.1} parent=5 // pred_fallthru
        _
      %p298 = scmp.le.s32.totalorder 1, %s21
      %p299 = scmp.lt.s32.totalorder %s21, 3
      %p300 = pnand %p298, %p299
      %p301 = pneg %p300
      // Predicated region
      $region45: #{tpu_custom_call.1} parent=5 // pred_check
        _
      $region46: #{tpu_custom_call.1} parent=5 // pred_check_branch
        %303 = sbr.rel (%p300) target = $region48
      $region47: #{tpu_custom_call.1} parent=5 // pred_region
        %s304 = ssub.s32 %s21, 1
        %s305 = sand.u32 %s46, 1
        %s306 = scalar_lea.sflag [#allocation3], %s305
        %s307 = sand.u32 %s46, 1
        %s308 = smul.addr %s307, 8
        %s309 = scalar_lea.vmem [#allocation2], %s308
        // Predicated region
        $region49: #{tpu_custom_call.1} parent=47 // pred_check
          %p310 = pneg %p59
        $region50: #{tpu_custom_call.1} parent=47 // pred_check_branch
          %312 = sbr.rel (%p310) target = $region52
        $region51: #{tpu_custom_call.1} parent=47 // pred_region
          %313 = dma.done %s306, 128
        $region52: #{tpu_custom_call.1} parent=47 // pred_fallthru
          _
        // Predicated region
        $region53: #{tpu_custom_call.1} parent=47 // pred_check
          %p314 = pneg %p80
        $region54: #{tpu_custom_call.1} parent=47 // pred_check_branch
          %316 = sbr.rel (%p314) target = $region56
        $region55: #{tpu_custom_call.1} parent=47 // pred_region
          %317 = dma.done [#allocation6], 512
        $region56: #{tpu_custom_call.1} parent=47 // pred_fallthru
          _
        // Predicated region
        $region57: #{tpu_custom_call.1} parent=47 // pred_check
          %p318 = pneg %p122
        $region58: #{tpu_custom_call.1} parent=47 // pred_check_branch
          %320 = sbr.rel (%p318) target = $region60
        $region59: #{tpu_custom_call.1} parent=47 // pred_region
          %321 = dma.done [#allocation6], 512
        $region60: #{tpu_custom_call.1} parent=47 // pred_fallthru
          _
        // Predicated region
        $region61: #{tpu_custom_call.1} parent=47 // pred_check
          %p322 = pneg %p164
        $region62: #{tpu_custom_call.1} parent=47 // pred_check_branch
          %324 = sbr.rel (%p322) target = $region64
        $region63: #{tpu_custom_call.1} parent=47 // pred_region
          %325 = dma.done [#allocation9], 512
        $region64: #{tpu_custom_call.1} parent=47 // pred_fallthru
          _
        %s326 = sand.u32 %s46, 1
        %s327 = scalar_lea.sflag [#allocation3], %s326
        %s328 = sand.u32 %s46, 1
        %s329 = smul.addr %s328, 8
        %s330 = scalar_lea.vmem [#allocation2], %s329
        %p331 = pneg %p59
        %p332 = pneg %p56
        %p333 = pneg %p80
        %p334 = pneg %p77
        %p335 = pneg %p101
        %p336 = pneg %p98
        %p337 = pneg %p122
        %p338 = pneg %p119
        %p339 = pneg %p143
        %p340 = pneg %p140
        %p341 = pneg %p164
        %p342 = pneg %p161
        %p343 = pneg %p185
        %p344 = pneg %p182
        %p345 = pneg %p213
        %p346 = pneg %p210
        %s347 = sand.u32 %s200, 1
        %s348 = scalar_lea.sflag [#allocation4], %s347
        %s349 = sand.u32 %s200, 1
        %s350 = smul.addr %s349, 8
        %s351 = scalar_lea.vmem [#allocation10], %s350
        %v352 = vld [vmem:[%s309] sm:$0xff]
        %v353 = vld [vmem:[#allocation5] sm:$0xff]
        %v354 = vld [vmem:[#allocation5 + $0x8] sm:$0xff]
        %v355 = vld [vmem:[#allocation5 + $0x10] sm:$0xff]
        %v356 = vld [vmem:[#allocation5 + $0x18] sm:$0xff]
        %v357 = vld [vmem:[%s2] sm:$0x1]
        %v359 = vlaneseq
        %v360 = vshrl.u32 %v359, 7
        %v361 = vsub.s32 0, %v360
        %v362 = vrot.slane %v357, %v361
        %vm364 = vcmask 261120
        %v366 = vsel %vm364, %v352, 0
        %368 = vmatprep.subr.mxu0 0.0
        %369 = vmatpush1.msra.mxu0 0.0
        %370 = vmatprep.subr.mxu0 0.0
        %371 = vmatpush1.msra.mxu0 0.0
        %372 = vmatprep.subr.mxu0 0.0
        %373 = vmatpush1.msra.mxu0 0.0
        %374 = vmatprep.subr.mxu0 0.0
        %375 = vmatpush1.msra.mxu0 0.0
        %376 = vmatprep.subr.mxu0 0.0
        %377 = vmatpush1.msra.mxu0 0.0
        %378 = vmatprep.subr.mxu0 0.0
        %379 = vmatpush1.msra.mxu0 0.0
        %380 = vmatprep.subr.mxu0 0.0
        %381 = vmatpush1.msra.mxu0 0.0
        %382 = vmatprep.subr.mxu0 0.0
        %383 = vmatpush1.msra.mxu0 0.0
        %384 = vmatprep.subr.mxu0 0.0
        %385 = vmatpush1.msra.mxu0 0.0
        %386 = vmatprep.subr.mxu0 0.0
        %387 = vmatpush1.msra.mxu0 0.0
        %388 = vmatprep.subr.mxu0 0.0
        %389 = vmatpush1.msra.mxu0 0.0
        %390 = vmatprep.subr.mxu0 0.0
        %391 = vmatpush1.msra.mxu0 0.0
        %392 = vmatprep.subr.mxu0 0.0
        %393 = vmatpush1.msra.mxu0 %v356
        %394 = vmatprep.subr.mxu0 0.0
        %395 = vmatpush1.msra.mxu0 %v355
        %396 = vmatprep.subr.mxu0 0.0
        %397 = vmatpush1.msra.mxu0 %v354
        %398 = vmatprep.subr.mxu0 0.0
        %399 = vmatpush1.msra.mxu0 %v353
        %400 = vmatprep.subr.mxu0 0.0
        %401 = vmatpush2.msra.mxu0 0.0
        %402 = vmatprep.subr.mxu0 0.0
        %403 = vmatpush2.msra.mxu0 0.0
        %404 = vmatprep.subr.mxu0 0.0
        %405 = vmatpush2.msra.mxu0 0.0
        %406 = vmatprep.subr.mxu0 0.0
        %407 = vmatpush2.msra.mxu0 0.0
        %408 = vmatprep.subr.mxu0 0.0
        %409 = vmatpush2.msra.mxu0 0.0
        %410 = vmatprep.subr.mxu0 0.0
        %411 = vmatpush2.msra.mxu0 0.0
        %412 = vmatprep.subr.mxu0 0.0
        %413 = vmatpush2.msra.mxu0 0.0
        %414 = vmatprep.subr.mxu0 0.0
        %415 = vmatpush2.msra.mxu0 0.0
        %416 = vmatprep.subr.mxu0 0.0
        %417 = vmatpush2.msra.mxu0 0.0
        %418 = vmatprep.subr.mxu0 0.0
        %419 = vmatpush2.msra.mxu0 0.0
        %420 = vmatprep.subr.mxu0 0.0
        %421 = vmatpush2.msra.mxu0 0.0
        %422 = vmatprep.subr.mxu0 0.0
        %423 = vmatpush2.msra.mxu0 0.0
        %424 = vmatprep.subr.mxu0 0.0
        %425 = vmatpush2.msra.mxu0 0.0
        %426 = vmatprep.subr.mxu0 0.0
        %427 = vmatpush2.msra.mxu0 0.0
        %428 = vmatprep.subr.mxu0 0.0
        %429 = vmatpush2.msra.mxu0 0.0
        %430 = vmatprep.subr.mxu0 0.0
        %431 = vmatpush2.msra.mxu0 0.0
        %432 = vmatprep.mubr.f32.mxu0 0.0
        %433 = vmatmul.mubr.f32.gmra.mxu0 %v366
        %v434 = vpop.f32.mrf.mxu0
        %v435 = vadd.f32 %v362, %v434
        %v436 = vpop.f32.mrf.mxu0
        %437 = vdwg.mxu0
        %v438 = vld [vmem:[#allocation7] sm:$0xff]
        %v439 = vld [vmem:[#allocation7 + $0x8] sm:$0xff]
        %v440 = vld [vmem:[#allocation7 + $0x10] sm:$0xff]
        %v441 = vld [vmem:[#allocation7 + $0x18] sm:$0xff]
        %v442 = vld [vmem:[%s4] sm:$0x1]
        %v444 = vlaneseq
        %v445 = vshrl.u32 %v444, 7
        %v446 = vsub.s32 0, %v445
        %v447 = vrot.slane %v442, %v446
        %449 = vmatprep.subr.mxu0 0.0
        %450 = vmatpush1.msra.mxu0 0.0
        %451 = vmatprep.subr.mxu0 0.0
        %452 = vmatpush1.msra.mxu0 0.0
        %453 = vmatprep.subr.mxu0 0.0
        %454 = vmatpush1.msra.mxu0 0.0
        %455 = vmatprep.subr.mxu0 0.0
        %456 = vmatpush1.msra.mxu0 0.0
        %457 = vmatprep.subr.mxu0 0.0
        %458 = vmatpush1.msra.mxu0 0.0
        %459 = vmatprep.subr.mxu0 0.0
        %460 = vmatpush1.msra.mxu0 0.0
        %461 = vmatprep.subr.mxu0 0.0
        %462 = vmatpush1.msra.mxu0 0.0
        %463 = vmatprep.subr.mxu0 0.0
        %464 = vmatpush1.msra.mxu0 0.0
        %465 = vmatprep.subr.mxu0 0.0
        %466 = vmatpush1.msra.mxu0 0.0
        %467 = vmatprep.subr.mxu0 0.0
        %468 = vmatpush1.msra.mxu0 0.0
        %469 = vmatprep.subr.mxu0 0.0
        %470 = vmatpush1.msra.mxu0 0.0
        %471 = vmatprep.subr.mxu0 0.0
        %472 = vmatpush1.msra.mxu0 0.0
        %473 = vmatprep.subr.mxu0 0.0
        %474 = vmatpush1.msra.mxu0 %v441
        %475 = vmatprep.subr.mxu0 0.0
        %476 = vmatpush1.msra.mxu0 %v440
        %477 = vmatprep.subr.mxu0 0.0
        %478 = vmatpush1.msra.mxu0 %v439
        %479 = vmatprep.subr.mxu0 0.0
        %480 = vmatpush1.msra.mxu0 %v438
        %481 = vmatprep.subr.mxu0 0.0
        %482 = vmatpush2.msra.mxu0 0.0
        %483 = vmatprep.subr.mxu0 0.0
        %484 = vmatpush2.msra.mxu0 0.0
        %485 = vmatprep.subr.mxu0 0.0
        %486 = vmatpush2.msra.mxu0 0.0
        %487 = vmatprep.subr.mxu0 0.0
        %488 = vmatpush2.msra.mxu0 0.0
        %489 = vmatprep.subr.mxu0 0.0
        %490 = vmatpush2.msra.mxu0 0.0
        %491 = vmatprep.subr.mxu0 0.0
        %492 = vmatpush2.msra.mxu0 0.0
        %493 = vmatprep.subr.mxu0 0.0
        %494 = vmatpush2.msra.mxu0 0.0
        %495 = vmatprep.subr.mxu0 0.0
        %496 = vmatpush2.msra.mxu0 0.0
        %497 = vmatprep.subr.mxu0 0.0
        %498 = vmatpush2.msra.mxu0 0.0
        %499 = vmatprep.subr.mxu0 0.0
        %500 = vmatpush2.msra.mxu0 0.0
        %501 = vmatprep.subr.mxu0 0.0
        %502 = vmatpush2.msra.mxu0 0.0
        %503 = vmatprep.subr.mxu0 0.0
        %504 = vmatpush2.msra.mxu0 0.0
        %505 = vmatprep.subr.mxu0 0.0
        %506 = vmatpush2.msra.mxu0 0.0
        %507 = vmatprep.subr.mxu0 0.0
        %508 = vmatpush2.msra.mxu0 0.0
        %509 = vmatprep.subr.mxu0 0.0
        %510 = vmatpush2.msra.mxu0 0.0
        %511 = vmatprep.subr.mxu0 0.0
        %512 = vmatpush2.msra.mxu0 0.0
        %513 = vmatprep.mubr.f32.mxu0 0.0
        %514 = vmatmul.mubr.f32.gmra.mxu0 %v366
        %v515 = vpop.f32.mrf.mxu0
        %v516 = vadd.f32 %v447, %v515
        %v517 = vpop.f32.mrf.mxu0
        %518 = vdwg.mxu0
        %vm519 = vcmask 64512
        %v521 = vsel %vm519, %v435, 0
        %v524 = vsel %vm519, %v516, 0
        %526 = vmatprep.subr.mxu0 0.0
        %527 = vmatpush1.xpose.msra.mxu0 0.0
        %528 = vmatprep.subr.mxu0 0.0
        %529 = vmatpush1.xpose.msra.mxu0 0.0
        %530 = vmatprep.subr.mxu0 0.0
        %531 = vmatpush1.xpose.msra.mxu0 0.0
        %532 = vmatprep.subr.mxu0 0.0
        %533 = vmatpush1.xpose.msra.mxu0 0.0
        %534 = vmatprep.subr.mxu0 0.0
        %535 = vmatpush1.xpose.msra.mxu0 0.0
        %536 = vmatprep.subr.mxu0 0.0
        %537 = vmatpush1.xpose.msra.mxu0 0.0
        %538 = vmatprep.subr.mxu0 0.0
        %539 = vmatpush1.xpose.msra.mxu0 0.0
        %540 = vmatprep.subr.mxu0 0.0
        %541 = vmatpush1.xpose.msra.mxu0 0.0
        %542 = vmatprep.subr.mxu0 0.0
        %543 = vmatpush1.xpose.msra.mxu0 0.0
        %544 = vmatprep.subr.mxu0 0.0
        %545 = vmatpush1.xpose.msra.mxu0 0.0
        %546 = vmatprep.subr.mxu0 0.0
        %547 = vmatpush1.xpose.msra.mxu0 0.0
        %548 = vmatprep.subr.mxu0 0.0
        %549 = vmatpush1.xpose.msra.mxu0 0.0
        %550 = vmatprep.subr.mxu0 0.0
        %551 = vmatpush1.xpose.msra.mxu0 0.0
        %552 = vmatprep.subr.mxu0 0.0
        %553 = vmatpush1.xpose.msra.mxu0 0.0
        %554 = vmatprep.subr.mxu0 0.0
        %555 = vmatpush1.xpose.msra.mxu0 0.0
        %556 = vmatprep.subr.mxu0 0.0
        %557 = vmatpush1.xpose.msra.mxu0 %v524
        %558 = vmatprep.subr.mxu0 0.0
        %559 = vmatpush2.xpose.msra.mxu0 0.0
        %560 = vmatprep.subr.mxu0 0.0
        %561 = vmatpush2.xpose.msra.mxu0 0.0
        %562 = vmatprep.subr.mxu0 0.0
        %563 = vmatpush2.xpose.msra.mxu0 0.0
        %564 = vmatprep.subr.mxu0 0.0
        %565 = vmatpush2.xpose.msra.mxu0 0.0
        %566 = vmatprep.subr.mxu0 0.0
        %567 = vmatpush2.xpose.msra.mxu0 0.0
        %568 = vmatprep.subr.mxu0 0.0
        %569 = vmatpush2.xpose.msra.mxu0 0.0
        %570 = vmatprep.subr.mxu0 0.0
        %571 = vmatpush2.xpose.msra.mxu0 0.0
        %572 = vmatprep.subr.mxu0 0.0
        %573 = vmatpush2.xpose.msra.mxu0 0.0
        %574 = vmatprep.subr.mxu0 0.0
        %575 = vmatpush2.xpose.msra.mxu0 0.0
        %576 = vmatprep.subr.mxu0 0.0
        %577 = vmatpush2.xpose.msra.mxu0 0.0
        %578 = vmatprep.subr.mxu0 0.0
        %579 = vmatpush2.xpose.msra.mxu0 0.0
        %580 = vmatprep.subr.mxu0 0.0
        %581 = vmatpush2.xpose.msra.mxu0 0.0
        %582 = vmatprep.subr.mxu0 0.0
        %583 = vmatpush2.xpose.msra.mxu0 0.0
        %584 = vmatprep.subr.mxu0 0.0
        %585 = vmatpush2.xpose.msra.mxu0 0.0
        %586 = vmatprep.subr.mxu0 0.0
        %587 = vmatpush2.xpose.msra.mxu0 0.0
        %588 = vmatprep.subr.mxu0 0.0
        %589 = vmatpush2.xpose.msra.mxu0 0.0
        %590 = vmatprep.mubr.f32.mxu0 0.0
        %591 = vmatmul.mubr.f32.gmra.mxu0 %v521
        %v592 = vpop.f32.mrf.mxu0
        %v593 = vadd.f32 0.0, %v592
        %v594 = vpop.f32.mrf.mxu0
        %595 = vdwg.mxu0
        %v596 = vsel %vm519, %v593, -inf
        %597 = vmax.xlane.f32.xlu0 %v596
        %v598 = vpop.xlane.xlu0 %597
        %v599 = vsub.f32 %v593, %v598
        %v600 = vmul.f32 %v599, 1.442695
        %v601 = vpow.pop %v600
        %v602 = vsel %vm519, %v601, 0.0
        %603 = vadd.xlane.f32.xlu0 %v602
        %v604 = vpop.xlane.xlu0 %603
        %v605 = vrcp.pop %v604
        %v606 = vmul.f32 %v601, %v605
        %607 = vrot.lane.b32.xlu0 %v516, 96
        %v608 = vpop.permute.xlu0 %607
        %v611 = vsel %vm519, %v606, 0
        %613 = vmatprep.subr.mxu0 0.0
        %614 = vmatpush1.msra.mxu0 0.0
        %615 = vmatprep.subr.mxu0 0.0
        %616 = vmatpush1.msra.mxu0 0.0
        %617 = vmatprep.subr.mxu0 0.0
        %618 = vmatpush1.msra.mxu0 0.0
        %619 = vmatprep.subr.mxu0 0.0
        %620 = vmatpush1.msra.mxu0 0.0
        %621 = vmatprep.subr.mxu0 0.0
        %622 = vmatpush1.msra.mxu0 0.0
        %623 = vmatprep.subr.mxu0 0.0
        %624 = vmatpush1.msra.mxu0 0.0
        %625 = vmatprep.subr.mxu0 0.0
        %626 = vmatpush1.msra.mxu0 0.0
        %627 = vmatprep.subr.mxu0 0.0
        %628 = vmatpush1.msra.mxu0 0.0
        %629 = vmatprep.subr.mxu0 0.0
        %630 = vmatpush1.msra.mxu0 0.0
        %631 = vmatprep.subr.mxu0 0.0
        %632 = vmatpush1.msra.mxu0 0.0
        %633 = vmatprep.subr.mxu0 0.0
        %634 = vmatpush1.msra.mxu0 0.0
        %635 = vmatprep.subr.mxu0 0.0
        %636 = vmatpush1.msra.mxu0 0.0
        %637 = vmatprep.subr.mxu0 0.0
        %638 = vmatpush1.msra.mxu0 0.0
        %639 = vmatprep.subr.mxu0 0.0
        %640 = vmatpush1.msra.mxu0 0.0
        %641 = vmatprep.subr.mxu0 0.0
        %642 = vmatpush1.msra.mxu0 0.0
        %643 = vmatprep.subr.mxu0 0.0
        %644 = vmatpush1.msra.mxu0 %v608
        %645 = vmatprep.subr.mxu0 0.0
        %646 = vmatpush2.msra.mxu0 0.0
        %647 = vmatprep.subr.mxu0 0.0
        %648 = vmatpush2.msra.mxu0 0.0
        %649 = vmatprep.subr.mxu0 0.0
        %650 = vmatpush2.msra.mxu0 0.0
        %651 = vmatprep.subr.mxu0 0.0
        %652 = vmatpush2.msra.mxu0 0.0
        %653 = vmatprep.subr.mxu0 0.0
        %654 = vmatpush2.msra.mxu0 0.0
        %655 = vmatprep.subr.mxu0 0.0
        %656 = vmatpush2.msra.mxu0 0.0
        %657 = vmatprep.subr.mxu0 0.0
        %658 = vmatpush2.msra.mxu0 0.0
        %659 = vmatprep.subr.mxu0 0.0
        %660 = vmatpush2.msra.mxu0 0.0
        %661 = vmatprep.subr.mxu0 0.0
        %662 = vmatpush2.msra.mxu0 0.0
        %663 = vmatprep.subr.mxu0 0.0
        %664 = vmatpush2.msra.mxu0 0.0
        %665 = vmatprep.subr.mxu0 0.0
        %666 = vmatpush2.msra.mxu0 0.0
        %667 = vmatprep.subr.mxu0 0.0
        %668 = vmatpush2.msra.mxu0 0.0
        %669 = vmatprep.subr.mxu0 0.0
        %670 = vmatpush2.msra.mxu0 0.0
        %671 = vmatprep.subr.mxu0 0.0
        %672 = vmatpush2.msra.mxu0 0.0
        %673 = vmatprep.subr.mxu0 0.0
        %674 = vmatpush2.msra.mxu0 0.0
        %675 = vmatprep.subr.mxu0 0.0
        %676 = vmatpush2.msra.mxu0 0.0
        %677 = vmatprep.mubr.f32.mxu0 0.0
        %678 = vmatmul.mubr.f32.gmra.mxu0 %v611
        %v679 = vpop.f32.mrf.mxu0
        %v680 = vadd.f32 0.0, %v679
        %v681 = vpop.f32.mrf.mxu0
        %682 = vdwg.mxu0
        %683 = vrot.lane.b32.xlu0 %v435, 120
        %v684 = vpop.permute.xlu0 %683
        %685 = vrot.lane.b32.xlu0 %v516, 120
        %v686 = vpop.permute.xlu0 %685
        %v687 = vsel %vm519, %v684, 0
        %v689 = vsel %vm519, %v686, 0
        %691 = vmatprep.subr.mxu0 0.0
        %692 = vmatpush1.xpose.msra.mxu0 0.0
        %693 = vmatprep.subr.mxu0 0.0
        %694 = vmatpush1.xpose.msra.mxu0 0.0
        %695 = vmatprep.subr.mxu0 0.0
        %696 = vmatpush1.xpose.msra.mxu0 0.0
        %697 = vmatprep.subr.mxu0 0.0
        %698 = vmatpush1.xpose.msra.mxu0 0.0
        %699 = vmatprep.subr.mxu0 0.0
        %700 = vmatpush1.xpose.msra.mxu0 0.0
        %701 = vmatprep.subr.mxu0 0.0
        %702 = vmatpush1.xpose.msra.mxu0 0.0
        %703 = vmatprep.subr.mxu0 0.0
        %704 = vmatpush1.xpose.msra.mxu0 0.0
        %705 = vmatprep.subr.mxu0 0.0
        %706 = vmatpush1.xpose.msra.mxu0 0.0
        %707 = vmatprep.subr.mxu0 0.0
        %708 = vmatpush1.xpose.msra.mxu0 0.0
        %709 = vmatprep.subr.mxu0 0.0
        %710 = vmatpush1.xpose.msra.mxu0 0.0
        %711 = vmatprep.subr.mxu0 0.0
        %712 = vmatpush1.xpose.msra.mxu0 0.0
        %713 = vmatprep.subr.mxu0 0.0
        %714 = vmatpush1.xpose.msra.mxu0 0.0
        %715 = vmatprep.subr.mxu0 0.0
        %716 = vmatpush1.xpose.msra.mxu0 0.0
        %717 = vmatprep.subr.mxu0 0.0
        %718 = vmatpush1.xpose.msra.mxu0 0.0
        %719 = vmatprep.subr.mxu0 0.0
        %720 = vmatpush1.xpose.msra.mxu0 0.0
        %721 = vmatprep.subr.mxu0 0.0
        %722 = vmatpush1.xpose.msra.mxu0 %v689
        %723 = vmatprep.subr.mxu0 0.0
        %724 = vmatpush2.xpose.msra.mxu0 0.0
        %725 = vmatprep.subr.mxu0 0.0
        %726 = vmatpush2.xpose.msra.mxu0 0.0
        %727 = vmatprep.subr.mxu0 0.0
        %728 = vmatpush2.xpose.msra.mxu0 0.0
        %729 = vmatprep.subr.mxu0 0.0
        %730 = vmatpush2.xpose.msra.mxu0 0.0
        %731 = vmatprep.subr.mxu0 0.0
        %732 = vmatpush2.xpose.msra.mxu0 0.0
        %733 = vmatprep.subr.mxu0 0.0
        %734 = vmatpush2.xpose.msra.mxu0 0.0
        %735 = vmatprep.subr.mxu0 0.0
        %736 = vmatpush2.xpose.msra.mxu0 0.0
        %737 = vmatprep.subr.mxu0 0.0
        %738 = vmatpush2.xpose.msra.mxu0 0.0
        %739 = vmatprep.subr.mxu0 0.0
        %740 = vmatpush2.xpose.msra.mxu0 0.0
        %741 = vmatprep.subr.mxu0 0.0
        %742 = vmatpush2.xpose.msra.mxu0 0.0
        %743 = vmatprep.subr.mxu0 0.0
        %744 = vmatpush2.xpose.msra.mxu0 0.0
        %745 = vmatprep.subr.mxu0 0.0
        %746 = vmatpush2.xpose.msra.mxu0 0.0
        %747 = vmatprep.subr.mxu0 0.0
        %748 = vmatpush2.xpose.msra.mxu0 0.0
        %749 = vmatprep.subr.mxu0 0.0
        %750 = vmatpush2.xpose.msra.mxu0 0.0
        %751 = vmatprep.subr.mxu0 0.0
        %752 = vmatpush2.xpose.msra.mxu0 0.0
        %753 = vmatprep.subr.mxu0 0.0
        %754 = vmatpush2.xpose.msra.mxu0 0.0
        %755 = vmatprep.mubr.f32.mxu0 0.0
        %756 = vmatmul.mubr.f32.gmra.mxu0 %v687
        %v757 = vpop.f32.mrf.mxu0
        %v758 = vadd.f32 0.0, %v757
        %v759 = vpop.f32.mrf.mxu0
        %760 = vdwg.mxu0
        %v761 = vsel %vm519, %v758, -inf
        %762 = vmax.xlane.f32.xlu0 %v761
        %v763 = vpop.xlane.xlu0 %762
        %v764 = vsub.f32 %v758, %v763
        %v765 = vmul.f32 %v764, 1.442695
        %v766 = vpow.pop %v765
        %v767 = vsel %vm519, %v766, 0.0
        %768 = vadd.xlane.f32.xlu0 %v767
        %v769 = vpop.xlane.xlu0 %768
        %v770 = vrcp.pop %v769
        %v771 = vmul.f32 %v766, %v770
        %772 = vrot.lane.b32.xlu0 %v516, 88
        %v773 = vpop.permute.xlu0 %772
        %v776 = vsel %vm519, %v771, 0
        %778 = vmatprep.subr.mxu0 0.0
        %779 = vmatpush1.msra.mxu0 0.0
        %780 = vmatprep.subr.mxu0 0.0
        %781 = vmatpush1.msra.mxu0 0.0
        %782 = vmatprep.subr.mxu0 0.0
        %783 = vmatpush1.msra.mxu0 0.0
        %784 = vmatprep.subr.mxu0 0.0
        %785 = vmatpush1.msra.mxu0 0.0
        %786 = vmatprep.subr.mxu0 0.0
        %787 = vmatpush1.msra.mxu0 0.0
        %788 = vmatprep.subr.mxu0 0.0
        %789 = vmatpush1.msra.mxu0 0.0
        %790 = vmatprep.subr.mxu0 0.0
        %791 = vmatpush1.msra.mxu0 0.0
        %792 = vmatprep.subr.mxu0 0.0
        %793 = vmatpush1.msra.mxu0 0.0
        %794 = vmatprep.subr.mxu0 0.0
        %795 = vmatpush1.msra.mxu0 0.0
        %796 = vmatprep.subr.mxu0 0.0
        %797 = vmatpush1.msra.mxu0 0.0
        %798 = vmatprep.subr.mxu0 0.0
        %799 = vmatpush1.msra.mxu0 0.0
        %800 = vmatprep.subr.mxu0 0.0
        %801 = vmatpush1.msra.mxu0 0.0
        %802 = vmatprep.subr.mxu0 0.0
        %803 = vmatpush1.msra.mxu0 0.0
        %804 = vmatprep.subr.mxu0 0.0
        %805 = vmatpush1.msra.mxu0 0.0
        %806 = vmatprep.subr.mxu0 0.0
        %807 = vmatpush1.msra.mxu0 0.0
        %808 = vmatprep.subr.mxu0 0.0
        %809 = vmatpush1.msra.mxu0 %v773
        %810 = vmatprep.subr.mxu0 0.0
        %811 = vmatpush2.msra.mxu0 0.0
        %812 = vmatprep.subr.mxu0 0.0
        %813 = vmatpush2.msra.mxu0 0.0
        %814 = vmatprep.subr.mxu0 0.0
        %815 = vmatpush2.msra.mxu0 0.0
        %816 = vmatprep.subr.mxu0 0.0
        %817 = vmatpush2.msra.mxu0 0.0
        %818 = vmatprep.subr.mxu0 0.0
        %819 = vmatpush2.msra.mxu0 0.0
        %820 = vmatprep.subr.mxu0 0.0
        %821 = vmatpush2.msra.mxu0 0.0
        %822 = vmatprep.subr.mxu0 0.0
        %823 = vmatpush2.msra.mxu0 0.0
        %824 = vmatprep.subr.mxu0 0.0
        %825 = vmatpush2.msra.mxu0 0.0
        %826 = vmatprep.subr.mxu0 0.0
        %827 = vmatpush2.msra.mxu0 0.0
        %828 = vmatprep.subr.mxu0 0.0
        %829 = vmatpush2.msra.mxu0 0.0
        %830 = vmatprep.subr.mxu0 0.0
        %831 = vmatpush2.msra.mxu0 0.0
        %832 = vmatprep.subr.mxu0 0.0
        %833 = vmatpush2.msra.mxu0 0.0
        %834 = vmatprep.subr.mxu0 0.0
        %835 = vmatpush2.msra.mxu0 0.0
        %836 = vmatprep.subr.mxu0 0.0
        %837 = vmatpush2.msra.mxu0 0.0
        %838 = vmatprep.subr.mxu0 0.0
        %839 = vmatpush2.msra.mxu0 0.0
        %840 = vmatprep.subr.mxu0 0.0
        %841 = vmatpush2.msra.mxu0 0.0
        %842 = vmatprep.mubr.f32.mxu0 0.0
        %843 = vmatmul.mubr.f32.gmra.mxu0 %v776
        %v844 = vpop.f32.mrf.mxu0
        %v845 = vadd.f32 0.0, %v844
        %v846 = vpop.f32.mrf.mxu0
        %847 = vdwg.mxu0
        %848 = vrot.lane.b32.xlu0 %v435, 112
        %v849 = vpop.permute.xlu0 %848
        %850 = vrot.lane.b32.xlu0 %v516, 112
        %v851 = vpop.permute.xlu0 %850
        %v852 = vsel %vm519, %v849, 0
        %v854 = vsel %vm519, %v851, 0
        %856 = vmatprep.subr.mxu0 0.0
        %857 = vmatpush1.xpose.msra.mxu0 0.0
        %858 = vmatprep.subr.mxu0 0.0
        %859 = vmatpush1.xpose.msra.mxu0 0.0
        %860 = vmatprep.subr.mxu0 0.0
        %861 = vmatpush1.xpose.msra.mxu0 0.0
        %862 = vmatprep.subr.mxu0 0.0
        %863 = vmatpush1.xpose.msra.mxu0 0.0
        %864 = vmatprep.subr.mxu0 0.0
        %865 = vmatpush1.xpose.msra.mxu0 0.0
        %866 = vmatprep.subr.mxu0 0.0
        %867 = vmatpush1.xpose.msra.mxu0 0.0
        %868 = vmatprep.subr.mxu0 0.0
        %869 = vmatpush1.xpose.msra.mxu0 0.0
        %870 = vmatprep.subr.mxu0 0.0
        %871 = vmatpush1.xpose.msra.mxu0 0.0
        %872 = vmatprep.subr.mxu0 0.0
        %873 = vmatpush1.xpose.msra.mxu0 0.0
        %874 = vmatprep.subr.mxu0 0.0
        %875 = vmatpush1.xpose.msra.mxu0 0.0
        %876 = vmatprep.subr.mxu0 0.0
        %877 = vmatpush1.xpose.msra.mxu0 0.0
        %878 = vmatprep.subr.mxu0 0.0
        %879 = vmatpush1.xpose.msra.mxu0 0.0
        %880 = vmatprep.subr.mxu0 0.0
        %881 = vmatpush1.xpose.msra.mxu0 0.0
        %882 = vmatprep.subr.mxu0 0.0
        %883 = vmatpush1.xpose.msra.mxu0 0.0
        %884 = vmatprep.subr.mxu0 0.0
        %885 = vmatpush1.xpose.msra.mxu0 0.0
        %886 = vmatprep.subr.mxu0 0.0
        %887 = vmatpush1.xpose.msra.mxu0 %v854
        %888 = vmatprep.subr.mxu0 0.0
        %889 = vmatpush2.xpose.msra.mxu0 0.0
        %890 = vmatprep.subr.mxu0 0.0
        %891 = vmatpush2.xpose.msra.mxu0 0.0
        %892 = vmatprep.subr.mxu0 0.0
        %893 = vmatpush2.xpose.msra.mxu0 0.0
        %894 = vmatprep.subr.mxu0 0.0
        %895 = vmatpush2.xpose.msra.mxu0 0.0
        %896 = vmatprep.subr.mxu0 0.0
        %897 = vmatpush2.xpose.msra.mxu0 0.0
        %898 = vmatprep.subr.mxu0 0.0
        %899 = vmatpush2.xpose.msra.mxu0 0.0
        %900 = vmatprep.subr.mxu0 0.0
        %901 = vmatpush2.xpose.msra.mxu0 0.0
        %902 = vmatprep.subr.mxu0 0.0
        %903 = vmatpush2.xpose.msra.mxu0 0.0
        %904 = vmatprep.subr.mxu0 0.0
        %905 = vmatpush2.xpose.msra.mxu0 0.0
        %906 = vmatprep.subr.mxu0 0.0
        %907 = vmatpush2.xpose.msra.mxu0 0.0
        %908 = vmatprep.subr.mxu0 0.0
        %909 = vmatpush2.xpose.msra.mxu0 0.0
        %910 = vmatprep.subr.mxu0 0.0
        %911 = vmatpush2.xpose.msra.mxu0 0.0
        %912 = vmatprep.subr.mxu0 0.0
        %913 = vmatpush2.xpose.msra.mxu0 0.0
        %914 = vmatprep.subr.mxu0 0.0
        %915 = vmatpush2.xpose.msra.mxu0 0.0
        %916 = vmatprep.subr.mxu0 0.0
        %917 = vmatpush2.xpose.msra.mxu0 0.0
        %918 = vmatprep.subr.mxu0 0.0
        %919 = vmatpush2.xpose.msra.mxu0 0.0
        %920 = vmatprep.mubr.f32.mxu0 0.0
        %921 = vmatmul.mubr.f32.gmra.mxu0 %v852
        %v922 = vpop.f32.mrf.mxu0
        %v923 = vadd.f32 0.0, %v922
        %v924 = vpop.f32.mrf.mxu0
        %925 = vdwg.mxu0
        %v926 = vsel %vm519, %v923, -inf
        %927 = vmax.xlane.f32.xlu0 %v926
        %v928 = vpop.xlane.xlu0 %927
        %v929 = vsub.f32 %v923, %v928
        %v930 = vmul.f32 %v929, 1.442695
        %v931 = vpow.pop %v930
        %v932 = vsel %vm519, %v931, 0.0
        %933 = vadd.xlane.f32.xlu0 %v932
        %v934 = vpop.xlane.xlu0 %933
        %v935 = vrcp.pop %v934
        %v936 = vmul.f32 %v931, %v935
        %937 = vrot.lane.b32.xlu0 %v516, 80
        %v938 = vpop.permute.xlu0 %937
        %v941 = vsel %vm519, %v936, 0
        %943 = vmatprep.subr.mxu0 0.0
        %944 = vmatpush1.msra.mxu0 0.0
        %945 = vmatprep.subr.mxu0 0.0
        %946 = vmatpush1.msra.mxu0 0.0
        %947 = vmatprep.subr.mxu0 0.0
        %948 = vmatpush1.msra.mxu0 0.0
        %949 = vmatprep.subr.mxu0 0.0
        %950 = vmatpush1.msra.mxu0 0.0
        %951 = vmatprep.subr.mxu0 0.0
        %952 = vmatpush1.msra.mxu0 0.0
        %953 = vmatprep.subr.mxu0 0.0
        %954 = vmatpush1.msra.mxu0 0.0
        %955 = vmatprep.subr.mxu0 0.0
        %956 = vmatpush1.msra.mxu0 0.0
        %957 = vmatprep.subr.mxu0 0.0
        %958 = vmatpush1.msra.mxu0 0.0
        %959 = vmatprep.subr.mxu0 0.0
        %960 = vmatpush1.msra.mxu0 0.0
        %961 = vmatprep.subr.mxu0 0.0
        %962 = vmatpush1.msra.mxu0 0.0
        %963 = vmatprep.subr.mxu0 0.0
        %964 = vmatpush1.msra.mxu0 0.0
        %965 = vmatprep.subr.mxu0 0.0
        %966 = vmatpush1.msra.mxu0 0.0
        %967 = vmatprep.subr.mxu0 0.0
        %968 = vmatpush1.msra.mxu0 0.0
        %969 = vmatprep.subr.mxu0 0.0
        %970 = vmatpush1.msra.mxu0 0.0
        %971 = vmatprep.subr.mxu0 0.0
        %972 = vmatpush1.msra.mxu0 0.0
        %973 = vmatprep.subr.mxu0 0.0
        %974 = vmatpush1.msra.mxu0 %v938
        %975 = vmatprep.subr.mxu0 0.0
        %976 = vmatpush2.msra.mxu0 0.0
        %977 = vmatprep.subr.mxu0 0.0
        %978 = vmatpush2.msra.mxu0 0.0
        %979 = vmatprep.subr.mxu0 0.0
        %980 = vmatpush2.msra.mxu0 0.0
        %981 = vmatprep.subr.mxu0 0.0
        %982 = vmatpush2.msra.mxu0 0.0
        %983 = vmatprep.subr.mxu0 0.0
        %984 = vmatpush2.msra.mxu0 0.0
        %985 = vmatprep.subr.mxu0 0.0
        %986 = vmatpush2.msra.mxu0 0.0
        %987 = vmatprep.subr.mxu0 0.0
        %988 = vmatpush2.msra.mxu0 0.0
        %989 = vmatprep.subr.mxu0 0.0
        %990 = vmatpush2.msra.mxu0 0.0
        %991 = vmatprep.subr.mxu0 0.0
        %992 = vmatpush2.msra.mxu0 0.0
        %993 = vmatprep.subr.mxu0 0.0
        %994 = vmatpush2.msra.mxu0 0.0
        %995 = vmatprep.subr.mxu0 0.0
        %996 = vmatpush2.msra.mxu0 0.0
        %997 = vmatprep.subr.mxu0 0.0
        %998 = vmatpush2.msra.mxu0 0.0
        %999 = vmatprep.subr.mxu0 0.0
        %1000 = vmatpush2.msra.mxu0 0.0
        %1001 = vmatprep.subr.mxu0 0.0
        %1002 = vmatpush2.msra.mxu0 0.0
        %1003 = vmatprep.subr.mxu0 0.0
        %1004 = vmatpush2.msra.mxu0 0.0
        %1005 = vmatprep.subr.mxu0 0.0
        %1006 = vmatpush2.msra.mxu0 0.0
        %1007 = vmatprep.mubr.f32.mxu0 0.0
        %1008 = vmatmul.mubr.f32.gmra.mxu0 %v941
        %v1009 = vpop.f32.mrf.mxu0
        %v1010 = vadd.f32 0.0, %v1009
        %v1011 = vpop.f32.mrf.mxu0
        %1012 = vdwg.mxu0
        %1013 = vrot.lane.b32.xlu0 %v435, 104
        %v1014 = vpop.permute.xlu0 %1013
        %1015 = vrot.lane.b32.xlu0 %v516, 104
        %v1016 = vpop.permute.xlu0 %1015
        %v1017 = vsel %vm519, %v1014, 0
        %v1019 = vsel %vm519, %v1016, 0
        %1021 = vmatprep.subr.mxu0 0.0
        %1022 = vmatpush1.xpose.msra.mxu0 0.0
        %1023 = vmatprep.subr.mxu0 0.0
        %1024 = vmatpush1.xpose.msra.mxu0 0.0
        %1025 = vmatprep.subr.mxu0 0.0
        %1026 = vmatpush1.xpose.msra.mxu0 0.0
        %1027 = vmatprep.subr.mxu0 0.0
        %1028 = vmatpush1.xpose.msra.mxu0 0.0
        %1029 = vmatprep.subr.mxu0 0.0
        %1030 = vmatpush1.xpose.msra.mxu0 0.0
        %1031 = vmatprep.subr.mxu0 0.0
        %1032 = vmatpush1.xpose.msra.mxu0 0.0
        %1033 = vmatprep.subr.mxu0 0.0
        %1034 = vmatpush1.xpose.msra.mxu0 0.0
        %1035 = vmatprep.subr.mxu0 0.0
        %1036 = vmatpush1.xpose.msra.mxu0 0.0
        %1037 = vmatprep.subr.mxu0 0.0
        %1038 = vmatpush1.xpose.msra.mxu0 0.0
        %1039 = vmatprep.subr.mxu0 0.0
        %1040 = vmatpush1.xpose.msra.mxu0 0.0
        %1041 = vmatprep.subr.mxu0 0.0
        %1042 = vmatpush1.xpose.msra.mxu0 0.0
        %1043 = vmatprep.subr.mxu0 0.0
        %1044 = vmatpush1.xpose.msra.mxu0 0.0
        %1045 = vmatprep.subr.mxu0 0.0
        %1046 = vmatpush1.xpose.msra.mxu0 0.0
        %1047 = vmatprep.subr.mxu0 0.0
        %1048 = vmatpush1.xpose.msra.mxu0 0.0
        %1049 = vmatprep.subr.mxu0 0.0
        %1050 = vmatpush1.xpose.msra.mxu0 0.0
        %1051 = vmatprep.subr.mxu0 0.0
        %1052 = vmatpush1.xpose.msra.mxu0 %v1019
        %1053 = vmatprep.subr.mxu0 0.0
        %1054 = vmatpush2.xpose.msra.mxu0 0.0
        %1055 = vmatprep.subr.mxu0 0.0
        %1056 = vmatpush2.xpose.msra.mxu0 0.0
        %1057 = vmatprep.subr.mxu0 0.0
        %1058 = vmatpush2.xpose.msra.mxu0 0.0
        %1059 = vmatprep.subr.mxu0 0.0
        %1060 = vmatpush2.xpose.msra.mxu0 0.0
        %1061 = vmatprep.subr.mxu0 0.0
        %1062 = vmatpush2.xpose.msra.mxu0 0.0
        %1063 = vmatprep.subr.mxu0 0.0
        %1064 = vmatpush2.xpose.msra.mxu0 0.0
        %1065 = vmatprep.subr.mxu0 0.0
        %1066 = vmatpush2.xpose.msra.mxu0 0.0
        %1067 = vmatprep.subr.mxu0 0.0
        %1068 = vmatpush2.xpose.msra.mxu0 0.0
        %1069 = vmatprep.subr.mxu0 0.0
        %1070 = vmatpush2.xpose.msra.mxu0 0.0
        %1071 = vmatprep.subr.mxu0 0.0
        %1072 = vmatpush2.xpose.msra.mxu0 0.0
        %1073 = vmatprep.subr.mxu0 0.0
        %1074 = vmatpush2.xpose.msra.mxu0 0.0
        %1075 = vmatprep.subr.mxu0 0.0
        %1076 = vmatpush2.xpose.msra.mxu0 0.0
        %1077 = vmatprep.subr.mxu0 0.0
        %1078 = vmatpush2.xpose.msra.mxu0 0.0
        %1079 = vmatprep.subr.mxu0 0.0
        %1080 = vmatpush2.xpose.msra.mxu0 0.0
        %1081 = vmatprep.subr.mxu0 0.0
        %1082 = vmatpush2.xpose.msra.mxu0 0.0
        %1083 = vmatprep.subr.mxu0 0.0
        %1084 = vmatpush2.xpose.msra.mxu0 0.0
        %1085 = vmatprep.mubr.f32.mxu0 0.0
        %1086 = vmatmul.mubr.f32.gmra.mxu0 %v1017
        %v1087 = vpop.f32.mrf.mxu0
        %v1088 = vadd.f32 0.0, %v1087
        %v1089 = vpop.f32.mrf.mxu0
        %1090 = vdwg.mxu0
        %v1091 = vsel %vm519, %v1088, -inf
        %1092 = vmax.xlane.f32.xlu0 %v1091
        %v1093 = vpop.xlane.xlu0 %1092
        %v1094 = vsub.f32 %v1088, %v1093
        %v1095 = vmul.f32 %v1094, 1.442695
        %v1096 = vpow.pop %v1095
        %v1097 = vsel %vm519, %v1096, 0.0
        %1098 = vadd.xlane.f32.xlu0 %v1097
        %v1099 = vpop.xlane.xlu0 %1098
        %v1100 = vrcp.pop %v1099
        %v1101 = vmul.f32 %v1096, %v1100
        %1102 = vrot.lane.b32.xlu0 %v516, 72
        %v1103 = vpop.permute.xlu0 %1102
        %v1106 = vsel %vm519, %v1101, 0
        %1108 = vmatprep.subr.mxu0 0.0
        %1109 = vmatpush1.msra.mxu0 0.0
        %1110 = vmatprep.subr.mxu0 0.0
        %1111 = vmatpush1.msra.mxu0 0.0
        %1112 = vmatprep.subr.mxu0 0.0
        %1113 = vmatpush1.msra.mxu0 0.0
        %1114 = vmatprep.subr.mxu0 0.0
        %1115 = vmatpush1.msra.mxu0 0.0
        %1116 = vmatprep.subr.mxu0 0.0
        %1117 = vmatpush1.msra.mxu0 0.0
        %1118 = vmatprep.subr.mxu0 0.0
        %1119 = vmatpush1.msra.mxu0 0.0
        %1120 = vmatprep.subr.mxu0 0.0
        %1121 = vmatpush1.msra.mxu0 0.0
        %1122 = vmatprep.subr.mxu0 0.0
        %1123 = vmatpush1.msra.mxu0 0.0
        %1124 = vmatprep.subr.mxu0 0.0
        %1125 = vmatpush1.msra.mxu0 0.0
        %1126 = vmatprep.subr.mxu0 0.0
        %1127 = vmatpush1.msra.mxu0 0.0
        %1128 = vmatprep.subr.mxu0 0.0
        %1129 = vmatpush1.msra.mxu0 0.0
        %1130 = vmatprep.subr.mxu0 0.0
        %1131 = vmatpush1.msra.mxu0 0.0
        %1132 = vmatprep.subr.mxu0 0.0
        %1133 = vmatpush1.msra.mxu0 0.0
        %1134 = vmatprep.subr.mxu0 0.0
        %1135 = vmatpush1.msra.mxu0 0.0
        %1136 = vmatprep.subr.mxu0 0.0
        %1137 = vmatpush1.msra.mxu0 0.0
        %1138 = vmatprep.subr.mxu0 0.0
        %1139 = vmatpush1.msra.mxu0 %v1103
        %1140 = vmatprep.subr.mxu0 0.0
        %1141 = vmatpush2.msra.mxu0 0.0
        %1142 = vmatprep.subr.mxu0 0.0
        %1143 = vmatpush2.msra.mxu0 0.0
        %1144 = vmatprep.subr.mxu0 0.0
        %1145 = vmatpush2.msra.mxu0 0.0
        %1146 = vmatprep.subr.mxu0 0.0
        %1147 = vmatpush2.msra.mxu0 0.0
        %1148 = vmatprep.subr.mxu0 0.0
        %1149 = vmatpush2.msra.mxu0 0.0
        %1150 = vmatprep.subr.mxu0 0.0
        %1151 = vmatpush2.msra.mxu0 0.0
        %1152 = vmatprep.subr.mxu0 0.0
        %1153 = vmatpush2.msra.mxu0 0.0
        %1154 = vmatprep.subr.mxu0 0.0
        %1155 = vmatpush2.msra.mxu0 0.0
        %1156 = vmatprep.subr.mxu0 0.0
        %1157 = vmatpush2.msra.mxu0 0.0
        %1158 = vmatprep.subr.mxu0 0.0
        %1159 = vmatpush2.msra.mxu0 0.0
        %1160 = vmatprep.subr.mxu0 0.0
        %1161 = vmatpush2.msra.mxu0 0.0
        %1162 = vmatprep.subr.mxu0 0.0
        %1163 = vmatpush2.msra.mxu0 0.0
        %1164 = vmatprep.subr.mxu0 0.0
        %1165 = vmatpush2.msra.mxu0 0.0
        %1166 = vmatprep.subr.mxu0 0.0
        %1167 = vmatpush2.msra.mxu0 0.0
        %1168 = vmatprep.subr.mxu0 0.0
        %1169 = vmatpush2.msra.mxu0 0.0
        %1170 = vmatprep.subr.mxu0 0.0
        %1171 = vmatpush2.msra.mxu0 0.0
        %1172 = vmatprep.mubr.f32.mxu0 0.0
        %1173 = vmatmul.mubr.f32.gmra.mxu0 %v1106
        %v1174 = vpop.f32.mrf.mxu0
        %v1175 = vadd.f32 0.0, %v1174
        %v1176 = vpop.f32.mrf.mxu0
        %1177 = vdwg.mxu0
        %1179 = vrot.lane.b32.xlu0 %v845, 8
        %v1180 = vpop.permute.xlu0 %1179
        %1183 = vrot.lane.b32.xlu0 %v1010, 16
        %v1184 = vpop.permute.xlu0 %1183
        %1187 = vrot.lane.b32.xlu0 %v1175, 24
        %v1188 = vpop.permute.xlu0 %1187
        %v1190 = vsel %vm519, %v680, %v1180
        %vm1191 = vcmask 130048
        %v1192 = vsel %vm1191, %v1190, %v1184
        %vm1193 = vcmask 195584
        %v1194 = vsel %vm1193, %v1192, %v1188
        %v1195 = vld [vmem:[#allocation8] sm:$0xff]
        %v1196 = vld [vmem:[#allocation8 + $0x8] sm:$0xff]
        %v1197 = vld [vmem:[#allocation8 + $0x10] sm:$0xff]
        %v1198 = vld [vmem:[#allocation8 + $0x18] sm:$0xff]
        %v1199 = vld [vmem:[%s6] sm:$0x1]
        %v1201 = vlaneseq
        %v1202 = vshrl.u32 %v1201, 7
        %v1203 = vsub.s32 0, %v1202
        %v1204 = vrot.slane %v1199, %v1203
        %v1207 = vsel %vm364, %v1194, 0
        %1209 = vmatprep.subr.mxu0 0.0
        %1210 = vmatpush1.msra.mxu0 0.0
        %1211 = vmatprep.subr.mxu0 0.0
        %1212 = vmatpush1.msra.mxu0 0.0
        %1213 = vmatprep.subr.mxu0 0.0
        %1214 = vmatpush1.msra.mxu0 0.0
        %1215 = vmatprep.subr.mxu0 0.0
        %1216 = vmatpush1.msra.mxu0 0.0
        %1217 = vmatprep.subr.mxu0 0.0
        %1218 = vmatpush1.msra.mxu0 0.0
        %1219 = vmatprep.subr.mxu0 0.0
        %1220 = vmatpush1.msra.mxu0 0.0
        %1221 = vmatprep.subr.mxu0 0.0
        %1222 = vmatpush1.msra.mxu0 0.0
        %1223 = vmatprep.subr.mxu0 0.0
        %1224 = vmatpush1.msra.mxu0 0.0
        %1225 = vmatprep.subr.mxu0 0.0
        %1226 = vmatpush1.msra.mxu0 0.0
        %1227 = vmatprep.subr.mxu0 0.0
        %1228 = vmatpush1.msra.mxu0 0.0
        %1229 = vmatprep.subr.mxu0 0.0
        %1230 = vmatpush1.msra.mxu0 0.0
        %1231 = vmatprep.subr.mxu0 0.0
        %1232 = vmatpush1.msra.mxu0 0.0
        %1233 = vmatprep.subr.mxu0 0.0
        %1234 = vmatpush1.msra.mxu0 %v1198
        %1235 = vmatprep.subr.mxu0 0.0
        %1236 = vmatpush1.msra.mxu0 %v1197
        %1237 = vmatprep.subr.mxu0 0.0
        %1238 = vmatpush1.msra.mxu0 %v1196
        %1239 = vmatprep.subr.mxu0 0.0
        %1240 = vmatpush1.msra.mxu0 %v1195
        %1241 = vmatprep.subr.mxu0 0.0
        %1242 = vmatpush2.msra.mxu0 0.0
        %1243 = vmatprep.subr.mxu0 0.0
        %1244 = vmatpush2.msra.mxu0 0.0
        %1245 = vmatprep.subr.mxu0 0.0
        %1246 = vmatpush2.msra.mxu0 0.0
        %1247 = vmatprep.subr.mxu0 0.0
        %1248 = vmatpush2.msra.mxu0 0.0
        %1249 = vmatprep.subr.mxu0 0.0
        %1250 = vmatpush2.msra.mxu0 0.0
        %1251 = vmatprep.subr.mxu0 0.0
        %1252 = vmatpush2.msra.mxu0 0.0
        %1253 = vmatprep.subr.mxu0 0.0
        %1254 = vmatpush2.msra.mxu0 0.0
        %1255 = vmatprep.subr.mxu0 0.0
        %1256 = vmatpush2.msra.mxu0 0.0
        %1257 = vmatprep.subr.mxu0 0.0
        %1258 = vmatpush2.msra.mxu0 0.0
        %1259 = vmatprep.subr.mxu0 0.0
        %1260 = vmatpush2.msra.mxu0 0.0
        %1261 = vmatprep.subr.mxu0 0.0
        %1262 = vmatpush2.msra.mxu0 0.0
        %1263 = vmatprep.subr.mxu0 0.0
        %1264 = vmatpush2.msra.mxu0 0.0
        %1265 = vmatprep.subr.mxu0 0.0
        %1266 = vmatpush2.msra.mxu0 0.0
        %1267 = vmatprep.subr.mxu0 0.0
        %1268 = vmatpush2.msra.mxu0 0.0
        %1269 = vmatprep.subr.mxu0 0.0
        %1270 = vmatpush2.msra.mxu0 0.0
        %1271 = vmatprep.subr.mxu0 0.0
        %1272 = vmatpush2.msra.mxu0 0.0
        %1273 = vmatprep.mubr.f32.mxu0 0.0
        %1274 = vmatmul.mubr.f32.gmra.mxu0 %v1207
        %v1275 = vpop.f32.mrf.mxu0
        %v1276 = vadd.f32 %v1204, %v1275
        %v1277 = vpop.f32.mrf.mxu0
        %1278 = vdwg.mxu0
        %1279 = vst.msk [vmem:[%s351] sm:$0xff] %vm364, %v1276
        %s1280 = sand.u32 %s200, 1
        %s1281 = scalar_lea.sflag [#allocation4], %s1280
        %s1282 = sand.u32 %s200, 1
        %s1283 = smul.addr %s1282, 8
        %s1284 = scalar_lea.vmem [#allocation10], %s1283
        // Predicated region
        $region65: #{tpu_custom_call.1} parent=47 // pred_check
          %p1285 = pneg %p210
        $region66: #{tpu_custom_call.1} parent=47 // pred_check_branch
          %1287 = sbr.rel (%p1285) target = $region68
        $region67: #{tpu_custom_call.1} parent=47 // pred_region
          %s1289 = ssub.s32 128, 128
          %1290 = vsyncadd %s1281, %s1289
          %s1291 = sadd.s32 %s31, %s30
          %s1292 = smul.addr %s1291, 128
          %s1293 = scalar_lea.hbm %s7, %s1292
          %s1295 = sshll.u32 %s1284, 4
          %s1296 = int_to_ptr.vmem [resolvable:$true] %s1295
          %1298 = dma.vmem_to_hbm [thread:$0]  %s1296, 128, %s1293, %s1281
        $region68: #{tpu_custom_call.1} parent=47 // pred_fallthru
          _
      $region48: #{tpu_custom_call.1} parent=5 // pred_fallthru
        _
      %p1299 = scmp.le.s32.totalorder 2, %s21
      // Predicated region
      $region69: #{tpu_custom_call.1} parent=5 // pred_check
        %p1300 = pneg %p1299
      $region70: #{tpu_custom_call.1} parent=5 // pred_check_branch
        %1302 = sbr.rel (%p1300) target = $region72
      $region71: #{tpu_custom_call.1} parent=5 // pred_region
        %s1303 = ssub.s32 %s21, 2
        // Predicated region
        $region73: #{tpu_custom_call.1} parent=71 // pred_check
          %p1304 = pneg %p216
        $region74: #{tpu_custom_call.1} parent=71 // pred_check_branch
          %1306 = sbr.rel (%p1304) target = $region76
        $region75: #{tpu_custom_call.1} parent=71 // pred_region
          %s1307 = sand.u32 %s201, 1
          %s1308 = scalar_lea.sflag [#allocation4], %s1307
          %s1309 = sand.u32 %s201, 1
          %s1310 = smul.addr %s1309, 8
          %s1311 = scalar_lea.vmem [#allocation10], %s1310
          %1312 = dma.done %s1308, 128
        $region76: #{tpu_custom_call.1} parent=71 // pred_fallthru
          _
      $region72: #{tpu_custom_call.1} parent=5 // pred_fallthru
        _
    $region6: #{tpu_custom_call.1} parent=1 // loop_footer
      %s25 = sadd.s32 1, %s21
    $region7: #{tpu_custom_call.1} parent=1 // loop_footer_branch
      %20 = sbr.rel target = $region3
    $region8: #{tpu_custom_call.1} parent=1 // loop_exit
      _
    %1313 = vsyncpa [#allocation3], 1
    %s1314 = scalar_lea.sflag [#allocation3], 1
    %1315 = vsyncpa %s1314, 1
    %1316 = vsyncpa [#allocation6], 1
    %1317 = vsyncpa [#allocation9], 1
    %1318 = vsyncpa [#allocation4], 1
    %s1319 = scalar_lea.sflag [#allocation4], 1
    %1320 = vsyncpa %s1319, 1

</llo_original>
